<compile_context>
chip_gen: v7x
topology: tpu7x:2x2x1
jax: 0.10.0
libtpu: 0.0.40
codegen_flags: <defaults>
</compile_context>

<pallas_src>
import jax
import jax.numpy as jnp
from jax.experimental import pallas as pl
from jax.experimental.pallas import tpu as pltpu


def _dft_matrices(H, W, dtype=jnp.float32):
    """Real/imag matrices realizing ortho rfft2 / irfft2 on flattened spatial axes."""
    Wf = W // 2 + 1
    h = jnp.arange(H, dtype=jnp.float32)
    w = jnp.arange(W, dtype=jnp.float32)
    hf = jnp.arange(H, dtype=jnp.float32)
    wf = jnp.arange(Wf, dtype=jnp.float32)
    scale = 1.0 / jnp.sqrt(jnp.float32(H * W))

    # Forward:  F[hf,wf] = scale * sum_{h,w} z[h,w] * exp(-2*pi*i*(h*hf/H + w*wf/W))
    phase_f = 2.0 * jnp.pi * (
        (h[:, None] * hf[None, :] / H)[:, None, :, None]
        + (w[:, None] * wf[None, :] / W)[None, :, None, :]
    )  # [H, W, Hf, Wf]
    Tr = (jnp.cos(phase_f) * scale).reshape(H * W, H * Wf).astype(dtype)
    Ti = (-jnp.sin(phase_f) * scale).reshape(H * W, H * Wf).astype(dtype)

    # Inverse (Hermitian extension along the W axis handled via per-bin weights;
    # sin(0)=sin(pi*w)=0 automatically drops the imag parts of DC/Nyquist columns,
    # matching irfft semantics).
    is_edge = (wf == 0)
    if W % 2 == 0:
        is_edge = is_edge | (wf == (W // 2))
    weight = jnp.where(is_edge, 1.0, 2.0)
    phase_b = 2.0 * jnp.pi * (
        (hf[:, None] * h[None, :] / H)[:, None, :, None]
        + (wf[:, None] * w[None, :] / W)[None, :, None, :]
    )  # [Hf, Wf, H, W]
    Br = (weight[None, :, None, None] * jnp.cos(phase_b) * scale).reshape(H * Wf, H * W).astype(dtype)
    Bi = (-weight[None, :, None, None] * jnp.sin(phase_b) * scale).reshape(H * Wf, H * W).astype(dtype)
    return Tr, Ti, Br, Bi


def _cross_fourier_kernel(xy_ref, w_in_ref, tr_ref, ti_ref,
                          w_spec_ref, b_spec_ref, br_ref, bi_ref, w_out_ref,
                          out_ref):
    """One grid step = TB batch elements; rows are ordered (sample, sx, sy, chan)."""
    f32 = jnp.float32
    bf16 = jnp.bfloat16
    tb = xy_ref.shape[0]
    pco = out_ref.shape[1]          # Sx*Sy*Co

    # conv_in (merged [Wx|Wy] pair-expanded weights, no bias) + identity norm + ReLU.
    # The per-sample dots are tiny (K = (Sx+Sy)*C); results are stacked along the
    # sublane axis so every big dot below sees M = TB*P*Cm rows.
    zs = [jax.nn.relu(jnp.dot(w_in_ref[...], xy_ref[t], preferred_element_type=f32))
          for t in range(tb)]
    z = zs[0] if tb == 1 else jnp.concatenate(zs, axis=0)            # (M, HW) f32
    zb = z.astype(bf16)

    # fused ortho rfft2 as two tile-aligned dots (real / imag kept separate):
    f_r = jnp.dot(zb, tr_ref[...], preferred_element_type=f32)       # (M, HWf) f32
    f_i = jnp.dot(zb, ti_ref[...], preferred_element_type=f32)       # (M, HWf) f32
    # Row-stack (sublane concat at an 8-aligned offset, no lane relayout).
    f_stack = jnp.concatenate([f_r, f_i], axis=0).astype(bf16)       # (2M, HWf)

    # spectral 1x1 conv: one block weight over (real/imag, sample, pair, channel)
    # + single broadcast bias + identity norm + ReLU.
    g = jax.nn.relu(
        jnp.dot(w_spec_ref[...], f_stack, preferred_element_type=f32)
        + b_spec_ref[...])                                            # (2M, HWf) f32

    # fused ortho irfft2 as two accumulating tile-aligned dots:
    m = f_r.shape[0]
    inv = (jnp.dot(g[:m].astype(bf16), br_ref[...], preferred_element_type=f32)
           + jnp.dot(g[m:].astype(bf16), bi_ref[...], preferred_element_type=f32))

    # conv_out (block-diagonal over (sample, pair), no bias) of (batched_xy + iffted)
    res = jnp.dot(w_out_ref[...], (z + inv).astype(bf16),
                  preferred_element_type=f32)                         # (TB*P*Co, HW)
    for t in range(tb):
        out_ref[t] = res[t * pco:(t + 1) * pco]


def _pick_tb(B, pair_rows):
    """Samples per grid step: largest divisor of B keeping >= 2 grid steps (v7x has
    two TensorCores to shard the 'parallel' axis across) and TB*P*Cm <= 64 rows
    (keeps the eye(TB*P)-expanded dense spectral / conv_out block weights cheap)."""
    best = 1
    for tb in range(1, B + 1):
        if B % tb:
            continue
        if B >= 2 and B // tb < 2:
            continue
        if tb * pair_rows > 64:
            continue
        best = tb
    return best


def cross_fourier_conv2d(x, y, params, *, tb=None):
    """x: [B, Sx, C, H, W], y: [B, Sy, C, H, W] -> [B, Sx, Sy, Co, H, W]."""
    B, Sx, C, H, W = x.shape
    Sy = y.shape[1]
    P = Sx * Sy
    HW = H * W
    w_in, w_mid, b_mid, w_out = params
    Cm = w_in.shape[0]
    Co = w_out.shape[0]
    bf16 = jnp.bfloat16
    f32 = jnp.float32

    TB = _pick_tb(B, P * Cm) if tb is None else tb
    assert B % TB == 0, (B, TB)
    M = TB * P * Cm          # sublane rows of the dominant dots
    S = TB * P               # (sample, pair) block count per grid step

    # ---- inputs: channel-concat x|y per batch element (no Sx*Sy HBM blow-up) -------
    xy2 = jnp.concatenate(
        [x.reshape(B, Sx * C, HW), y.reshape(B, Sy * C, HW)], axis=1).astype(bf16)

    # ---- ortho DFT matrices (kept separate -> tile-aligned real/imag dots) ---------
    Tr, Ti, Br, Bi = _dft_matrices(H, W)
    tr_b, ti_b = Tr.astype(bf16), Ti.astype(bf16)
    br_b, bi_b = Br.astype(bf16), Bi.astype(bf16)

    # ---- conv_in: merged [Wx | Wy] pair-expanded weight, rows ordered (sx, sy, cm) --
    w_in_x, w_in_y = w_in[:, :C], w_in[:, C:]
    wx = jnp.einsum('ij,oc->iojc', jnp.eye(Sx, dtype=f32), w_in_x)            # (Sx,Cm,Sx,C)
    wx_full = jnp.broadcast_to(wx[:, None], (Sx, Sy, Cm, Sx, C)).reshape(P * Cm, Sx * C)
    wy = jnp.einsum('ij,oc->iojc', jnp.eye(Sy, dtype=f32), w_in_y)            # (Sy,Cm,Sy,C)
    wy_full = jnp.broadcast_to(wy[None], (Sx, Sy, Cm, Sy, C)).reshape(P * Cm, Sy * C)
    w_in_cat = jnp.concatenate([wx_full, wy_full], axis=1).astype(bf16)       # (P*Cm, (Sx+Sy)*C)

    # ---- spectral 1x1 conv: block weight over (real/imag, sample, pair, channel) ----
    # PyTorch channel interleave is (C L) with L=2 (real, imag): in/out index = 2*c + l.
    # TODO(synk): for larger TB*Sx*Sy switch to a per-sample loop with the shared
    # (2Cm x 2Cm) weight — the eye(S)-expansion is S-fold redundant in MXU MACs.
    w4 = w_mid.reshape(Cm, 2, Cm, 2)                                          # [c',l',c,l]
    w_spec = jnp.einsum('ulvm,pq->lpumqv', w4, jnp.eye(S, dtype=f32))
    w_spec = w_spec.reshape(2 * M, 2 * M).astype(bf16)
    b_spec = jnp.broadcast_to(b_mid.reshape(Cm, 2).T[:, None, :], (2, S, Cm))
    b_spec = b_spec.reshape(2 * M, 1).astype(f32)

    # ---- conv_out: block-diagonal over (sample, pair); rows ordered (t, sx, sy, co) -
    w_out_full = jnp.kron(jnp.eye(S, dtype=f32), w_out).astype(bf16)          # (S*Co, M)

    def full(arr):
        nd = arr.ndim
        return pl.BlockSpec(arr.shape, lambda i, _nd=nd: (0,) * _nd)

    # TODO(synk): single-buffer the grid-invariant weight/twiddle refs
    # (pipeline_mode=pl.Buffered(1)) once verified on this JAX version; at these
    # sizes default double-buffering of them costs < 1 MiB of VMEM.
    out2d = pl.pallas_call(
        _cross_fourier_kernel,
        out_shape=jax.ShapeDtypeStruct((B, P * Co, HW), jnp.float32),
        grid=(B // TB,),
        in_specs=[
            pl.BlockSpec((TB, (Sx + Sy) * C, HW), lambda i: (i, 0, 0)),
            full(w_in_cat), full(tr_b), full(ti_b),
            full(w_spec), full(b_spec), full(br_b), full(bi_b), full(w_out_full),
        ],
        out_specs=pl.BlockSpec((TB, P * Co, HW), lambda i: (i, 0, 0)),
        compiler_params=pltpu.CompilerParams(
            dimension_semantics=("parallel",),
            vmem_limit_bytes=32 * 1024 * 1024),
    )(xy2, w_in_cat, tr_b, ti_b, w_spec, b_spec, br_b, bi_b, w_out_full)

    return out2d.reshape(B, Sx, Sy, Co, H, W)


def reference(x, y, params):
    """Pure-JAX f32 reference (jnp.fft), mirrors the PyTorch forward exactly."""
    B, Sx, C, H, W = x.shape
    Sy = y.shape[1]
    N = B * Sx * Sy
    Wf = W // 2 + 1
    w_in, w_mid, b_mid, w_out = params
    Cm = w_in.shape[0]
    Co = w_out.shape[0]

    xs = jnp.broadcast_to(x[:, :, None], (B, Sx, Sy, C, H, W))
    ys = jnp.broadcast_to(y[:, None], (B, Sx, Sy, C, H, W))
    xy = jnp.concatenate([xs, ys], axis=3).reshape(N, 2 * C, H, W)

    z = jax.nn.relu(jnp.einsum('ok,nkhw->nohw', w_in, xy))          # conv_in + ReLU
    f = jnp.fft.rfftn(z, axes=(-2, -1), norm='ortho')
    st = jnp.stack([f.real, f.imag], axis=-1)                       # N,Cm,H,Wf,2
    st = st.transpose(0, 1, 4, 2, 3).reshape(N, 2 * Cm, H, Wf)      # 'B C H W L -> B (C L) H W'
    g = jnp.einsum('ok,nkhw->nohw', w_mid, st) + b_mid[None, :, None, None]
    g = jax.nn.relu(g)                                              # norm=Identity (norm_type=None)
    g = g.reshape(N, Cm, 2, H, Wf).transpose(0, 1, 3, 4, 2)         # 'B (C L) H W -> B C H W L'
    fc = g[..., 0] + 1j * g[..., 1]
    inv = jnp.fft.irfftn(fc, s=(H, W), axes=(-2, -1), norm='ortho')
    out = jnp.einsum('ok,nkhw->nohw', w_out, z + inv)               # conv_out
    return out.reshape(B, Sx, Sy, Co, H, W)


if __name__ == "__main__":
    B, Sx, Sy = 4, 2, 3
    C_in, C_out, H, W = 4, 8, 16, 16
    reduction = 2
    Cm = C_out // reduction            # mid_channels

    key = jax.random.PRNGKey(0)
    kx, ky, k1, k2, k3, k4 = jax.random.split(key, 6)
    x = jax.random.normal(kx, (B, Sx, C_in, H, W), jnp.float32)
    y = jax.random.normal(ky, (B, Sy, C_in, H, W), jnp.float32)

    # Deterministic synthetic parameters (1x1 conv weights as [out, in] matrices).
    w_in = jax.random.normal(k1, (Cm, 2 * C_in), jnp.float32) / jnp.sqrt(2.0 * C_in)
    w_mid = jax.random.normal(k2, (2 * Cm, 2 * Cm), jnp.float32) / jnp.sqrt(2.0 * Cm)
    b_mid = 0.1 * jax.random.normal(k3, (2 * Cm,), jnp.float32)
    w_out = jax.random.normal(k4, (C_out, Cm), jnp.float32) / jnp.sqrt(1.0 * Cm)
    params = (w_in, w_mid, b_mid, w_out)

    out = jax.block_until_ready(jax.jit(cross_fourier_conv2d)(x, y, params))
    ref = jax.block_until_ready(reference(x, y, params))
    assert out.shape == (B, Sx, Sy, C_out, H, W), out.shape

    err = float(jnp.max(jnp.abs(out - ref)))
    scale = float(jnp.max(jnp.abs(ref)))
    # bf16 MXU operands (f32 accumulation): allow ~3% of the output scale.
    assert err <= 3e-2 * max(1.0, scale), f"max abs err {err} (ref scale {scale})"
    print("KERNEL_OK")
</pallas_src>

<mosaic_0001>
module attributes {stable_mosaic.version = 11 : i64} {
  func.func @_cross_fourier_kernel(%arg0: i32, %arg1: memref<2x20x256xbf16, #tpu.memory_space<vmem>>, %arg2: memref<24x20xbf16, #tpu.memory_space<vmem>>, %arg3: memref<256x144xbf16, #tpu.memory_space<vmem>>, %arg4: memref<256x144xbf16, #tpu.memory_space<vmem>>, %arg5: memref<96x96xbf16, #tpu.memory_space<vmem>>, %arg6: memref<96x1xf32, #tpu.memory_space<vmem>>, %arg7: memref<144x256xbf16, #tpu.memory_space<vmem>>, %arg8: memref<144x256xbf16, #tpu.memory_space<vmem>>, %arg9: memref<96x48xbf16, #tpu.memory_space<vmem>>, %arg10: memref<2x48x256xf32, #tpu.memory_space<vmem>>) attributes {dimension_semantics = [#tpu.dimension_semantics<parallel>], iteration_bounds = array<i64: 2>, scalar_prefetch = 0 : i64, scratch_operands = 0 : i64, tpu.core_type = #tpu.core_type<tc>, window_params = [{transform_indices = @transform_0, window_bounds = array<i64: 2, 20, 256>}, {pipeline_mode = #tpu.pipeline_mode<synchronous>, transform_indices = @transform_1, window_bounds = array<i64: 24, 20>}, {pipeline_mode = #tpu.pipeline_mode<synchronous>, transform_indices = @transform_2, window_bounds = array<i64: 256, 144>}, {pipeline_mode = #tpu.pipeline_mode<synchronous>, transform_indices = @transform_3, window_bounds = array<i64: 256, 144>}, {pipeline_mode = #tpu.pipeline_mode<synchronous>, transform_indices = @transform_4, window_bounds = array<i64: 96, 96>}, {pipeline_mode = #tpu.pipeline_mode<synchronous>, transform_indices = @transform_5, window_bounds = array<i64: 96, 1>}, {pipeline_mode = #tpu.pipeline_mode<synchronous>, transform_indices = @transform_6, window_bounds = array<i64: 144, 256>}, {pipeline_mode = #tpu.pipeline_mode<synchronous>, transform_indices = @transform_7, window_bounds = array<i64: 144, 256>}, {pipeline_mode = #tpu.pipeline_mode<synchronous>, transform_indices = @transform_8, window_bounds = array<i64: 96, 48>}, {transform_indices = @transform_9, window_bounds = array<i64: 2, 48, 256>}]} {
    %c0 = arith.constant 0 : index
    %c0_0 = arith.constant 0 : index
    %0 = vector.load %arg2[%c0, %c0_0] : memref<24x20xbf16, #tpu.memory_space<vmem>>, vector<24x20xbf16>
    %c0_1 = arith.constant 0 : index
    %c0_2 = arith.constant 0 : index
    %c0_3 = arith.constant 0 : index
    %1 = vector.load %arg1[%c0_1, %c0_2, %c0_3] : memref<2x20x256xbf16, #tpu.memory_space<vmem>>, vector<1x20x256xbf16>
    %2 = vector.shape_cast %1 : vector<1x20x256xbf16> to vector<20x256xbf16>
    %cst = arith.constant dense<0.000000e+00> : vector<24x256xf32>
    %3 = tpu.matmul %0, %2, %cst {dimension_numbers = #tpu.dot_dimension_numbers<[1], [0], [0], [1], [0, 0, 1, 1], [], []>} : vector<24x20xbf16>, vector<20x256xbf16>, vector<24x256xf32> -> vector<24x256xf32>
    %cst_4 = arith.constant 0.000000e+00 : f32
    %4 = vector.broadcast %cst_4 : f32 to vector<24x256xf32>
    %5 = arith.maximumf %3, %4 : vector<24x256xf32>
    %c0_5 = arith.constant 0 : index
    %c0_6 = arith.constant 0 : index
    %6 = vector.load %arg2[%c0_5, %c0_6] : memref<24x20xbf16, #tpu.memory_space<vmem>>, vector<24x20xbf16>
    %c1 = arith.constant 1 : index
    %c0_7 = arith.constant 0 : index
    %c0_8 = arith.constant 0 : index
    %7 = vector.load %arg1[%c1, %c0_7, %c0_8] : memref<2x20x256xbf16, #tpu.memory_space<vmem>>, vector<1x20x256xbf16>
    %8 = vector.shape_cast %7 : vector<1x20x256xbf16> to vector<20x256xbf16>
    %cst_9 = arith.constant dense<0.000000e+00> : vector<24x256xf32>
    %9 = tpu.matmul %6, %8, %cst_9 {dimension_numbers = #tpu.dot_dimension_numbers<[1], [0], [0], [1], [0, 0, 1, 1], [], []>} : vector<24x20xbf16>, vector<20x256xbf16>, vector<24x256xf32> -> vector<24x256xf32>
    %cst_10 = arith.constant 0.000000e+00 : f32
    %10 = vector.broadcast %cst_10 : f32 to vector<24x256xf32>
    %11 = arith.maximumf %9, %10 : vector<24x256xf32>
    %12 = tpu.concatenate %5, %11 in 0 : vector<24x256xf32>, vector<24x256xf32> -> vector<48x256xf32>
    %13 = arith.truncf %12 : vector<48x256xf32> to vector<48x256xbf16>
    %c0_11 = arith.constant 0 : index
    %c0_12 = arith.constant 0 : index
    %14 = vector.load %arg3[%c0_11, %c0_12] : memref<256x144xbf16, #tpu.memory_space<vmem>>, vector<256x144xbf16>
    %cst_13 = arith.constant dense<0.000000e+00> : vector<48x144xf32>
    %15 = tpu.matmul %13, %14, %cst_13 {dimension_numbers = #tpu.dot_dimension_numbers<[1], [0], [0], [1], [0, 0, 1, 1], [], []>} : vector<48x256xbf16>, vector<256x144xbf16>, vector<48x144xf32> -> vector<48x144xf32>
    %c0_14 = arith.constant 0 : index
    %c0_15 = arith.constant 0 : index
    %16 = vector.load %arg4[%c0_14, %c0_15] : memref<256x144xbf16, #tpu.memory_space<vmem>>, vector<256x144xbf16>
    %cst_16 = arith.constant dense<0.000000e+00> : vector<48x144xf32>
    %17 = tpu.matmul %13, %16, %cst_16 {dimension_numbers = #tpu.dot_dimension_numbers<[1], [0], [0], [1], [0, 0, 1, 1], [], []>} : vector<48x256xbf16>, vector<256x144xbf16>, vector<48x144xf32> -> vector<48x144xf32>
    %18 = tpu.concatenate %15, %17 in 0 : vector<48x144xf32>, vector<48x144xf32> -> vector<96x144xf32>
    %19 = arith.truncf %18 : vector<96x144xf32> to vector<96x144xbf16>
    %c0_17 = arith.constant 0 : index
    %c0_18 = arith.constant 0 : index
    %20 = vector.load %arg5[%c0_17, %c0_18] : memref<96x96xbf16, #tpu.memory_space<vmem>>, vector<96x96xbf16>
    %cst_19 = arith.constant dense<0.000000e+00> : vector<96x144xf32>
    %21 = tpu.matmul %20, %19, %cst_19 {dimension_numbers = #tpu.dot_dimension_numbers<[1], [0], [0], [1], [0, 0, 1, 1], [], []>} : vector<96x96xbf16>, vector<96x144xbf16>, vector<96x144xf32> -> vector<96x144xf32>
    %c0_20 = arith.constant 0 : index
    %c0_21 = arith.constant 0 : index
    %22 = vector.load %arg6[%c0_20, %c0_21] : memref<96x1xf32, #tpu.memory_space<vmem>>, vector<96x1xf32>
    %23 = vector.broadcast %22 : vector<96x1xf32> to vector<96x144xf32>
    %24 = arith.addf %21, %23 : vector<96x144xf32>
    %cst_22 = arith.constant 0.000000e+00 : f32
    %25 = vector.broadcast %cst_22 : f32 to vector<96x144xf32>
    %26 = arith.maximumf %24, %25 : vector<96x144xf32>
    %27 = vector.extract_strided_slice %26 {offsets = [0, 0], sizes = [48, 144], strides = [1, 1]} : vector<96x144xf32> to vector<48x144xf32>
    %28 = arith.truncf %27 : vector<48x144xf32> to vector<48x144xbf16>
    %c0_23 = arith.constant 0 : index
    %c0_24 = arith.constant 0 : index
    %29 = vector.load %arg7[%c0_23, %c0_24] : memref<144x256xbf16, #tpu.memory_space<vmem>>, vector<144x256xbf16>
    %cst_25 = arith.constant dense<0.000000e+00> : vector<48x256xf32>
    %30 = tpu.matmul %28, %29, %cst_25 {dimension_numbers = #tpu.dot_dimension_numbers<[1], [0], [0], [1], [0, 0, 1, 1], [], []>} : vector<48x144xbf16>, vector<144x256xbf16>, vector<48x256xf32> -> vector<48x256xf32>
    %31 = vector.extract_strided_slice %26 {offsets = [48, 0], sizes = [48, 144], strides = [1, 1]} : vector<96x144xf32> to vector<48x144xf32>
    %32 = arith.truncf %31 : vector<48x144xf32> to vector<48x144xbf16>
    %c0_26 = arith.constant 0 : index
    %c0_27 = arith.constant 0 : index
    %33 = vector.load %arg8[%c0_26, %c0_27] : memref<144x256xbf16, #tpu.memory_space<vmem>>, vector<144x256xbf16>
    %cst_28 = arith.constant dense<0.000000e+00> : vector<48x256xf32>
    %34 = tpu.matmul %32, %33, %cst_28 {dimension_numbers = #tpu.dot_dimension_numbers<[1], [0], [0], [1], [0, 0, 1, 1], [], []>} : vector<48x144xbf16>, vector<144x256xbf16>, vector<48x256xf32> -> vector<48x256xf32>
    %35 = arith.addf %30, %34 : vector<48x256xf32>
    %c0_29 = arith.constant 0 : index
    %c0_30 = arith.constant 0 : index
    %36 = vector.load %arg9[%c0_29, %c0_30] : memref<96x48xbf16, #tpu.memory_space<vmem>>, vector<96x48xbf16>
    %37 = arith.addf %12, %35 : vector<48x256xf32>
    %38 = arith.truncf %37 : vector<48x256xf32> to vector<48x256xbf16>
    %cst_31 = arith.constant dense<0.000000e+00> : vector<96x256xf32>
    %39 = tpu.matmul %36, %38, %cst_31 {dimension_numbers = #tpu.dot_dimension_numbers<[1], [0], [0], [1], [0, 0, 1, 1], [], []>} : vector<96x48xbf16>, vector<48x256xbf16>, vector<96x256xf32> -> vector<96x256xf32>
    %40 = vector.extract_strided_slice %39 {offsets = [0, 0], sizes = [48, 256], strides = [1, 1]} : vector<96x256xf32> to vector<48x256xf32>
    %c0_32 = arith.constant 0 : index
    %c0_33 = arith.constant 0 : index
    %c0_34 = arith.constant 0 : index
    %41 = vector.load %arg10[%c0_32, %c0_33, %c0_34] : memref<2x48x256xf32, #tpu.memory_space<vmem>>, vector<1x48x256xf32>
    %42 = vector.shape_cast %41 : vector<1x48x256xf32> to vector<48x256xf32>
    %43 = vector.shape_cast %40 : vector<48x256xf32> to vector<1x48x256xf32>
    tpu.vector_store %arg10[%c0_32, %c0_33, %c0_34], %43 {strides = array<i32>} : memref<2x48x256xf32, #tpu.memory_space<vmem>>, vector<1x48x256xf32>,
    %44 = vector.extract_strided_slice %39 {offsets = [48, 0], sizes = [48, 256], strides = [1, 1]} : vector<96x256xf32> to vector<48x256xf32>
    %c1_35 = arith.constant 1 : index
    %c0_36 = arith.constant 0 : index
    %c0_37 = arith.constant 0 : index
    %45 = vector.load %arg10[%c1_35, %c0_36, %c0_37] : memref<2x48x256xf32, #tpu.memory_space<vmem>>, vector<1x48x256xf32>
    %46 = vector.shape_cast %45 : vector<1x48x256xf32> to vector<48x256xf32>
    %47 = vector.shape_cast %44 : vector<48x256xf32> to vector<1x48x256xf32>
    tpu.vector_store %arg10[%c1_35, %c0_36, %c0_37], %47 {strides = array<i32>} : memref<2x48x256xf32, #tpu.memory_space<vmem>>, vector<1x48x256xf32>,
    return
  }
  func.func @transform_0(%arg0: i32) -> (i32, i32, i32) {
    %c0_i32 = arith.constant 0 : i32
    %c0_i32_0 = arith.constant 0 : i32
    %c0_i32_1 = arith.constant 0 : i32
    return %arg0, %c0_i32, %c0_i32_0 : i32, i32, i32
  }
  func.func @transform_1(%arg0: i32) -> (i32, i32) {
    %c0_i32 = arith.constant 0 : i32
    %c0_i32_0 = arith.constant 0 : i32
    %c0_i32_1 = arith.constant 0 : i32
    return %c0_i32, %c0_i32_0 : i32, i32
  }
  func.func @transform_2(%arg0: i32) -> (i32, i32) {
    %c0_i32 = arith.constant 0 : i32
    %c0_i32_0 = arith.constant 0 : i32
    %c0_i32_1 = arith.constant 0 : i32
    return %c0_i32, %c0_i32_0 : i32, i32
  }
  func.func @transform_3(%arg0: i32) -> (i32, i32) {
    %c0_i32 = arith.constant 0 : i32
    %c0_i32_0 = arith.constant 0 : i32
    %c0_i32_1 = arith.constant 0 : i32
    return %c0_i32, %c0_i32_0 : i32, i32
  }
  func.func @transform_4(%arg0: i32) -> (i32, i32) {
    %c0_i32 = arith.constant 0 : i32
    %c0_i32_0 = arith.constant 0 : i32
    %c0_i32_1 = arith.constant 0 : i32
    return %c0_i32, %c0_i32_0 : i32, i32
  }
  func.func @transform_5(%arg0: i32) -> (i32, i32) {
    %c0_i32 = arith.constant 0 : i32
    %c0_i32_0 = arith.constant 0 : i32
    %c0_i32_1 = arith.constant 0 : i32
    return %c0_i32, %c0_i32_0 : i32, i32
  }
  func.func @transform_6(%arg0: i32) -> (i32, i32) {
    %c0_i32 = arith.constant 0 : i32
    %c0_i32_0 = arith.constant 0 : i32
    %c0_i32_1 = arith.constant 0 : i32
    return %c0_i32, %c0_i32_0 : i32, i32
  }
  func.func @transform_7(%arg0: i32) -> (i32, i32) {
    %c0_i32 = arith.constant 0 : i32
    %c0_i32_0 = arith.constant 0 : i32
    %c0_i32_1 = arith.constant 0 : i32
    return %c0_i32, %c0_i32_0 : i32, i32
  }
  func.func @transform_8(%arg0: i32) -> (i32, i32) {
    %c0_i32 = arith.constant 0 : i32
    %c0_i32_0 = arith.constant 0 : i32
    %c0_i32_1 = arith.constant 0 : i32
    return %c0_i32, %c0_i32_0 : i32, i32
  }
  func.func @transform_9(%arg0: i32) -> (i32, i32, i32) {
    %c0_i32 = arith.constant 0 : i32
    %c0_i32_0 = arith.constant 0 : i32
    %c0_i32_1 = arith.constant 0 : i32
    return %arg0, %c0_i32, %c0_i32_0 : i32, i32, i32
  }
}

</mosaic_0001>

<llo_original>
// kernel: cross_fourier_conv2d.1
$region0: #{cross_fourier_conv2d.1}
  #allocation0 [shape = 'u32[]', space=smem, size = 0x4, offset = 0x4, fixed_abs, tag = 'smem constant byte address 0x4 - core index']
  #allocation1 [shape = 'u32[144,128]{1,0:T(1,128)}', space=vmem, size = 0x12000, scoped, tag = 'internal scratch']
  %s0 = inlined_call_operand.vmem [shape: bf16[4,20,256], index: 0, kind: input, shape index: {}]
  %s1 = inlined_call_operand.vmem [shape: bf16[24,20], index: 1, kind: input, shape index: {}]
  %s2 = inlined_call_operand.vmem [shape: bf16[256,144], index: 2, kind: input, shape index: {}]
  %s3 = inlined_call_operand.vmem [shape: bf16[256,144], index: 3, kind: input, shape index: {}]
  %s4 = inlined_call_operand.vmem [shape: bf16[96,96], index: 4, kind: input, shape index: {}]
  %s5 = inlined_call_operand.vmem [shape: f32[96,1], index: 5, kind: input, shape index: {}]
  %s6 = inlined_call_operand.vmem [shape: bf16[144,256], index: 6, kind: input, shape index: {}]
  %s7 = inlined_call_operand.vmem [shape: bf16[144,256], index: 7, kind: input, shape index: {}]
  %s8 = inlined_call_operand.vmem [shape: bf16[96,48], index: 8, kind: input, shape index: {}]
  %s9 = inlined_call_operand.vmem [shape: f32[4,48,256], index: 9, kind: output, shape index: {}]
  %s10 = sld [smem:[#allocation0]]
  $region69: #{cross_fourier_conv2d.1} parent=0
    _
  %s12 = ssub.s32 1, %s10
  %s13 = scalar_select 0, %s12, %s10
  loop: start=0, step=1, limit=4
  $region2: #{cross_fourier_conv2d.1} parent=0 // loop_pre_header
    _
  $region3: #{cross_fourier_conv2d.1} parent=0 // loop_header
    %s15 = sphi 0, %s19
    %p16 = scmp.ge.s32.totalorder %s15, 4
    %s25 = sphi 0, %s27
    %s28 = sphi 0, %s25
    %s29 = sphi 0, %s28
    %s45 = sphi 0, %s29
    %s49 = sphi 0, %s49
    %s51 = sphi 0, %s49
    %s52 = sphi 0, %s51
    %s66 = sphi 0, %s52
    %s70 = sphi 0, %s70
    %s72 = sphi 0, %s70
    %s73 = sphi 0, %s72
    %s87 = sphi 0, %s73
    %s91 = sphi 0, %s91
    %s93 = sphi 0, %s91
    %s94 = sphi 0, %s93
    %s108 = sphi 0, %s94
    %s112 = sphi 0, %s112
    %s114 = sphi 0, %s112
    %s115 = sphi 0, %s114
    %s129 = sphi 0, %s115
    %s133 = sphi 0, %s133
    %s135 = sphi 0, %s133
    %s136 = sphi 0, %s135
    %s150 = sphi 0, %s136
    %s154 = sphi 0, %s154
    %s156 = sphi 0, %s154
    %s157 = sphi 0, %s156
    %s171 = sphi 0, %s157
    %s175 = sphi 0, %s175
    %s177 = sphi 0, %s175
    %s178 = sphi 0, %s177
    %s192 = sphi 0, %s178
    %s196 = sphi 0, %s196
    %s198 = sphi 0, %s196
    %s199 = sphi 0, %s198
    %s213 = sphi 0, %s199
    %s219 = sphi 0, %s221
    %s222 = sphi 0, %s219
    %s223 = sphi 0, %s222
    %s239 = sphi 0, %s223
  $region4: #{cross_fourier_conv2d.1} parent=0 // loop_header_branch
    %18 = sbr.rel (%p16) target = $region8
  $region5: #{cross_fourier_conv2d.1} parent=0 // loop_body
    %s20 = ssub.s32 %s15, 1
    %s21 = ssub.s32 %s15, 2
    %s22 = sadd.s32 %s15, 1
    %s23 = ssub.s32 %s15, %s22
    %p24 = scmp.eq.s32.totalorder %s23, 0
    %s26 = sadd.s32 %s25, 1
    %s27 = scalar_select %p24, %s25, %s26
    %p30 = pneg %p24
    %p31 = scmp.eq.s32.totalorder %s15, 1
    %p32 = por %p30, %p31
    %p33 = scmp.ne.s32.totalorder %s25, %s28
    %p34 = scmp.eq.s32.totalorder %s15, 0
    %p35 = por %p33, %p34
    %p36 = scmp.ne.s32.totalorder %s25, %s28
    %p37 = scmp.eq.s32.totalorder %s20, 1
    %p38 = por %p36, %p37
    %p39 = scmp.ne.s32.totalorder %s28, %s29
    %p40 = scmp.eq.s32.totalorder %s20, 0
    %p41 = por %p39, %p40
    %p42 = scmp.ne.s32.totalorder %s28, %s29
    %p43 = scmp.eq.s32.totalorder %s21, 1
    %p44 = por %p42, %p43
    %p46 = scmp.ne.s32.totalorder %s29, %s45
    %p47 = scmp.eq.s32.totalorder %s21, 0
    %p48 = por %p46, %p47
    %s50 = sadd.s32 %s49, 1
    %p53 = scmp.eq.s32.totalorder %s15, 1
    %p54 = scmp.ne.s32.totalorder %s49, %s51
    %p55 = scmp.eq.s32.totalorder %s15, 0
    %p56 = por %p54, %p55
    %p57 = scmp.ne.s32.totalorder %s49, %s51
    %p58 = scmp.eq.s32.totalorder %s20, 1
    %p59 = por %p57, %p58
    %p60 = scmp.ne.s32.totalorder %s51, %s52
    %p61 = scmp.eq.s32.totalorder %s20, 0
    %p62 = por %p60, %p61
    %p63 = scmp.ne.s32.totalorder %s51, %s52
    %p64 = scmp.eq.s32.totalorder %s21, 1
    %p65 = por %p63, %p64
    %p67 = scmp.ne.s32.totalorder %s52, %s66
    %p68 = scmp.eq.s32.totalorder %s21, 0
    %p69 = por %p67, %p68
    %s71 = sadd.s32 %s70, 1
    %p74 = scmp.eq.s32.totalorder %s15, 1
    %p75 = scmp.ne.s32.totalorder %s70, %s72
    %p76 = scmp.eq.s32.totalorder %s15, 0
    %p77 = por %p75, %p76
    %p78 = scmp.ne.s32.totalorder %s70, %s72
    %p79 = scmp.eq.s32.totalorder %s20, 1
    %p80 = por %p78, %p79
    %p81 = scmp.ne.s32.totalorder %s72, %s73
    %p82 = scmp.eq.s32.totalorder %s20, 0
    %p83 = por %p81, %p82
    %p84 = scmp.ne.s32.totalorder %s72, %s73
    %p85 = scmp.eq.s32.totalorder %s21, 1
    %p86 = por %p84, %p85
    %p88 = scmp.ne.s32.totalorder %s73, %s87
    %p89 = scmp.eq.s32.totalorder %s21, 0
    %p90 = por %p88, %p89
    %s92 = sadd.s32 %s91, 1
    %p95 = scmp.eq.s32.totalorder %s15, 1
    %p96 = scmp.ne.s32.totalorder %s91, %s93
    %p97 = scmp.eq.s32.totalorder %s15, 0
    %p98 = por %p96, %p97
    %p99 = scmp.ne.s32.totalorder %s91, %s93
    %p100 = scmp.eq.s32.totalorder %s20, 1
    %p101 = por %p99, %p100
    %p102 = scmp.ne.s32.totalorder %s93, %s94
    %p103 = scmp.eq.s32.totalorder %s20, 0
    %p104 = por %p102, %p103
    %p105 = scmp.ne.s32.totalorder %s93, %s94
    %p106 = scmp.eq.s32.totalorder %s21, 1
    %p107 = por %p105, %p106
    %p109 = scmp.ne.s32.totalorder %s94, %s108
    %p110 = scmp.eq.s32.totalorder %s21, 0
    %p111 = por %p109, %p110
    %s113 = sadd.s32 %s112, 1
    %p116 = scmp.eq.s32.totalorder %s15, 1
    %p117 = scmp.ne.s32.totalorder %s112, %s114
    %p118 = scmp.eq.s32.totalorder %s15, 0
    %p119 = por %p117, %p118
    %p120 = scmp.ne.s32.totalorder %s112, %s114
    %p121 = scmp.eq.s32.totalorder %s20, 1
    %p122 = por %p120, %p121
    %p123 = scmp.ne.s32.totalorder %s114, %s115
    %p124 = scmp.eq.s32.totalorder %s20, 0
    %p125 = por %p123, %p124
    %p126 = scmp.ne.s32.totalorder %s114, %s115
    %p127 = scmp.eq.s32.totalorder %s21, 1
    %p128 = por %p126, %p127
    %p130 = scmp.ne.s32.totalorder %s115, %s129
    %p131 = scmp.eq.s32.totalorder %s21, 0
    %p132 = por %p130, %p131
    %s134 = sadd.s32 %s133, 1
    %p137 = scmp.eq.s32.totalorder %s15, 1
    %p138 = scmp.ne.s32.totalorder %s133, %s135
    %p139 = scmp.eq.s32.totalorder %s15, 0
    %p140 = por %p138, %p139
    %p141 = scmp.ne.s32.totalorder %s133, %s135
    %p142 = scmp.eq.s32.totalorder %s20, 1
    %p143 = por %p141, %p142
    %p144 = scmp.ne.s32.totalorder %s135, %s136
    %p145 = scmp.eq.s32.totalorder %s20, 0
    %p146 = por %p144, %p145
    %p147 = scmp.ne.s32.totalorder %s135, %s136
    %p148 = scmp.eq.s32.totalorder %s21, 1
    %p149 = por %p147, %p148
    %p151 = scmp.ne.s32.totalorder %s136, %s150
    %p152 = scmp.eq.s32.totalorder %s21, 0
    %p153 = por %p151, %p152
    %s155 = sadd.s32 %s154, 1
    %p158 = scmp.eq.s32.totalorder %s15, 1
    %p159 = scmp.ne.s32.totalorder %s154, %s156
    %p160 = scmp.eq.s32.totalorder %s15, 0
    %p161 = por %p159, %p160
    %p162 = scmp.ne.s32.totalorder %s154, %s156
    %p163 = scmp.eq.s32.totalorder %s20, 1
    %p164 = por %p162, %p163
    %p165 = scmp.ne.s32.totalorder %s156, %s157
    %p166 = scmp.eq.s32.totalorder %s20, 0
    %p167 = por %p165, %p166
    %p168 = scmp.ne.s32.totalorder %s156, %s157
    %p169 = scmp.eq.s32.totalorder %s21, 1
    %p170 = por %p168, %p169
    %p172 = scmp.ne.s32.totalorder %s157, %s171
    %p173 = scmp.eq.s32.totalorder %s21, 0
    %p174 = por %p172, %p173
    %s176 = sadd.s32 %s175, 1
    %p179 = scmp.eq.s32.totalorder %s15, 1
    %p180 = scmp.ne.s32.totalorder %s175, %s177
    %p181 = scmp.eq.s32.totalorder %s15, 0
    %p182 = por %p180, %p181
    %p183 = scmp.ne.s32.totalorder %s175, %s177
    %p184 = scmp.eq.s32.totalorder %s20, 1
    %p185 = por %p183, %p184
    %p186 = scmp.ne.s32.totalorder %s177, %s178
    %p187 = scmp.eq.s32.totalorder %s20, 0
    %p188 = por %p186, %p187
    %p189 = scmp.ne.s32.totalorder %s177, %s178
    %p190 = scmp.eq.s32.totalorder %s21, 1
    %p191 = por %p189, %p190
    %p193 = scmp.ne.s32.totalorder %s178, %s192
    %p194 = scmp.eq.s32.totalorder %s21, 0
    %p195 = por %p193, %p194
    %s197 = sadd.s32 %s196, 1
    %p200 = scmp.eq.s32.totalorder %s15, 1
    %p201 = scmp.ne.s32.totalorder %s196, %s198
    %p202 = scmp.eq.s32.totalorder %s15, 0
    %p203 = por %p201, %p202
    %p204 = scmp.ne.s32.totalorder %s196, %s198
    %p205 = scmp.eq.s32.totalorder %s20, 1
    %p206 = por %p204, %p205
    %p207 = scmp.ne.s32.totalorder %s198, %s199
    %p208 = scmp.eq.s32.totalorder %s20, 0
    %p209 = por %p207, %p208
    %p210 = scmp.ne.s32.totalorder %s198, %s199
    %p211 = scmp.eq.s32.totalorder %s21, 1
    %p212 = por %p210, %p211
    %p214 = scmp.ne.s32.totalorder %s199, %s213
    %p215 = scmp.eq.s32.totalorder %s21, 0
    %p216 = por %p214, %p215
    %s217 = ssub.s32 %s15, %s22
    %p218 = scmp.eq.s32.totalorder %s217, 0
    %s220 = sadd.s32 %s219, 1
    %s221 = scalar_select %p218, %s219, %s220
    %p224 = pneg %p218
    %p225 = scmp.eq.s32.totalorder %s15, 1
    %p226 = por %p224, %p225
    %p227 = scmp.ne.s32.totalorder %s219, %s222
    %p228 = scmp.eq.s32.totalorder %s15, 0
    %p229 = por %p227, %p228
    %p230 = scmp.ne.s32.totalorder %s219, %s222
    %p231 = scmp.eq.s32.totalorder %s20, 1
    %p232 = por %p230, %p231
    %p233 = scmp.ne.s32.totalorder %s222, %s223
    %p234 = scmp.eq.s32.totalorder %s20, 0
    %p235 = por %p233, %p234
    %p236 = scmp.ne.s32.totalorder %s222, %s223
    %p237 = scmp.eq.s32.totalorder %s21, 1
    %p238 = por %p236, %p237
    %p240 = scmp.ne.s32.totalorder %s223, %s239
    %p241 = scmp.eq.s32.totalorder %s21, 0
    %p242 = por %p240, %p241
    %p243 = scmp.le.s32.totalorder 1, %s15
    %p244 = scmp.lt.s32.totalorder %s15, 3
    %p245 = pnand %p243, %p244
    %p246 = pneg %p245
    // Predicated region
    $region9: #{cross_fourier_conv2d.1} parent=5 // pred_check
      _
    $region10: #{cross_fourier_conv2d.1} parent=5 // pred_check_branch
      %248 = sbr.rel (%p245) target = $region12
    $region11: #{cross_fourier_conv2d.1} parent=5 // pred_region
      %s249 = ssub.s32 %s15, 1
      // Predicated region
      $region13: #{cross_fourier_conv2d.1} parent=11 // pred_check
        %p250 = pneg %p62
      $region14: #{cross_fourier_conv2d.1} parent=11 // pred_check_branch
        %252 = sbr.rel (%p250) target = $region16
      $region15: #{cross_fourier_conv2d.1} parent=11 // pred_region
        _
      $region16: #{cross_fourier_conv2d.1} parent=11 // pred_fallthru
        _
      // Predicated region
      $region17: #{cross_fourier_conv2d.1} parent=11 // pred_check
        %p253 = pneg %p83
      $region18: #{cross_fourier_conv2d.1} parent=11 // pred_check_branch
        %255 = sbr.rel (%p253) target = $region20
      $region19: #{cross_fourier_conv2d.1} parent=11 // pred_region
        _
      $region20: #{cross_fourier_conv2d.1} parent=11 // pred_fallthru
        _
      // Predicated region
      $region21: #{cross_fourier_conv2d.1} parent=11 // pred_check
        %p256 = pneg %p104
      $region22: #{cross_fourier_conv2d.1} parent=11 // pred_check_branch
        %258 = sbr.rel (%p256) target = $region24
      $region23: #{cross_fourier_conv2d.1} parent=11 // pred_region
        _
      $region24: #{cross_fourier_conv2d.1} parent=11 // pred_fallthru
        _
      // Predicated region
      $region25: #{cross_fourier_conv2d.1} parent=11 // pred_check
        %p259 = pneg %p125
      $region26: #{cross_fourier_conv2d.1} parent=11 // pred_check_branch
        %261 = sbr.rel (%p259) target = $region28
      $region27: #{cross_fourier_conv2d.1} parent=11 // pred_region
        _
      $region28: #{cross_fourier_conv2d.1} parent=11 // pred_fallthru
        _
      // Predicated region
      $region29: #{cross_fourier_conv2d.1} parent=11 // pred_check
        %p262 = pneg %p146
      $region30: #{cross_fourier_conv2d.1} parent=11 // pred_check_branch
        %264 = sbr.rel (%p262) target = $region32
      $region31: #{cross_fourier_conv2d.1} parent=11 // pred_region
        _
      $region32: #{cross_fourier_conv2d.1} parent=11 // pred_fallthru
        _
      // Predicated region
      $region33: #{cross_fourier_conv2d.1} parent=11 // pred_check
        %p265 = pneg %p167
      $region34: #{cross_fourier_conv2d.1} parent=11 // pred_check_branch
        %267 = sbr.rel (%p265) target = $region36
      $region35: #{cross_fourier_conv2d.1} parent=11 // pred_region
        _
      $region36: #{cross_fourier_conv2d.1} parent=11 // pred_fallthru
        _
      // Predicated region
      $region37: #{cross_fourier_conv2d.1} parent=11 // pred_check
        %p268 = pneg %p188
      $region38: #{cross_fourier_conv2d.1} parent=11 // pred_check_branch
        %270 = sbr.rel (%p268) target = $region40
      $region39: #{cross_fourier_conv2d.1} parent=11 // pred_region
        _
      $region40: #{cross_fourier_conv2d.1} parent=11 // pred_fallthru
        _
      // Predicated region
      $region41: #{cross_fourier_conv2d.1} parent=11 // pred_check
        %p271 = pneg %p209
      $region42: #{cross_fourier_conv2d.1} parent=11 // pred_check_branch
        %273 = sbr.rel (%p271) target = $region44
      $region43: #{cross_fourier_conv2d.1} parent=11 // pred_region
        _
      $region44: #{cross_fourier_conv2d.1} parent=11 // pred_fallthru
        _
    $region12: #{cross_fourier_conv2d.1} parent=5 // pred_fallthru
      _
    %p274 = scmp.lt.s32.totalorder %s15, 2
    // Predicated region
    $region45: #{cross_fourier_conv2d.1} parent=5 // pred_check
      %p275 = pneg %p274
    $region46: #{cross_fourier_conv2d.1} parent=5 // pred_check_branch
      %277 = sbr.rel (%p275) target = $region48
    $region47: #{cross_fourier_conv2d.1} parent=5 // pred_region
      // Predicated region
      $region49: #{cross_fourier_conv2d.1} parent=47 // pred_check
        %p278 = pneg %p35
      $region50: #{cross_fourier_conv2d.1} parent=47 // pred_check_branch
        %280 = sbr.rel (%p278) target = $region52
      $region51: #{cross_fourier_conv2d.1} parent=47 // pred_region
        %s281 = smul.u32 2, %s15
        %p282 = scmp.lt.s32.totalorder %s281, 3
        %s283 = scalar_select %p282, %s281, 3
        %s284 = smul.addr %s283, 6
        %s285 = smul.addr %s284, 4
        %s286 = scalar_lea.vmem %s0, %s285
        %s287 = smul.u32 2, %s15
      $region52: #{cross_fourier_conv2d.1} parent=47 // pred_fallthru
        _
    $region48: #{cross_fourier_conv2d.1} parent=5 // pred_fallthru
      _
    %p288 = scmp.le.s32.totalorder 1, %s15
    %p289 = scmp.lt.s32.totalorder %s15, 3
    %p290 = pnand %p288, %p289
    %p291 = pneg %p290
    // Predicated region
    $region53: #{cross_fourier_conv2d.1} parent=5 // pred_check
      _
    $region54: #{cross_fourier_conv2d.1} parent=5 // pred_check_branch
      %293 = sbr.rel (%p290) target = $region56
    $region55: #{cross_fourier_conv2d.1} parent=5 // pred_region
      %s294 = ssub.s32 %s15, 1
      %s295 = smul.u32 2, %s20
      %p296 = scmp.lt.s32.totalorder %s295, 3
      %s297 = scalar_select %p296, %s295, 3
      %s298 = smul.addr %s297, 6
      %s299 = smul.addr %s298, 4
      %s300 = scalar_lea.vmem %s0, %s299
      %p301 = pneg %p41
      %p302 = pneg %p38
      %p303 = pneg %p62
      %p304 = pneg %p59
      %p305 = pneg %p83
      %p306 = pneg %p80
      %p307 = pneg %p104
      %p308 = pneg %p101
      %p309 = pneg %p125
      %p310 = pneg %p122
      %p311 = pneg %p146
      %p312 = pneg %p143
      %p313 = pneg %p167
      %p314 = pneg %p164
      %p315 = pneg %p188
      %p316 = pneg %p185
      %p317 = pneg %p209
      %p318 = pneg %p206
      %p319 = pneg %p235
      %p320 = pneg %p232
      %s321 = smul.u32 2, %s20
      %p322 = scmp.lt.s32.totalorder %s321, 3
      %s323 = scalar_select %p322, %s321, 3
      %s324 = smul.addr %s323, 12
      %s325 = smul.addr %s324, 8
      %s326 = scalar_lea.vmem %s9, %s325
      %s327 = smul.u32 2, %s20
      %p328 = scmp.lt.s32.totalorder %s327, 3
      %s329 = scalar_select %p328, %s327, 3
      %s330 = smul.addr %s329, 6
      %s331 = smul.addr %s330, 4
      %s332 = scalar_lea.vmem %s0, %s331
      %s333 = smul.u32 2, %s20
      %s334 = smul.u32 2, %s20
      %p335 = scmp.lt.s32.totalorder %s334, 3
      %s336 = scalar_select %p335, %s334, 3
      %s337 = smul.addr %s336, 12
      %s338 = smul.addr %s337, 8
      %s339 = scalar_lea.vmem %s9, %s338
      %s340 = smul.u32 2, %s20
      %v342 = vld [vmem:[%s1] sm:$0xf]
      %v343 = vld [vmem:[%s1 + $0x4] sm:$0xf]
      %v344 = vld [vmem:[%s1 + $0x8] sm:$0xf]
      %v345 = vld [vmem:[%s332] sm:$0xff]
      %v346 = vld [vmem:[%s332 + $0x8] sm:$0xff]
      %v347 = vld [vmem:[%s332 + $0x10] sm:$0x33]
      %v351 = vunpack.c.l.b16 %v342
      %v352 = vunpack.c.l.b16 %v343
      %v353 = vunpack.c.l.b16 %v344
      %v354 = vpack.c.b16 %v352, %v351
      %v355 = vpack.c.b16 %v353, %v353
      %v359 = vunpack.c.l.b16 %v345
      %v360 = vunpack.c.h.b16 %v345
      %v361 = vunpack.c.l.b16 %v346
      %v362 = vunpack.c.h.b16 %v346
      %v363 = vunpack.c.l.b16 %v347
      %v364 = vunpack.c.h.b16 %v347
      %v365 = vpack.c.b16 %v361, %v359
      %v366 = vpack.c.b16 %v362, %v360
      %v367 = vpack.c.b16 %v363, %v363
      %v368 = vpack.c.b16 %v364, %v364
      %vm371 = vcmask 162816
      %v373 = vsel %vm371, %v354, 0
      %v376 = vsel %vm371, %v355, 0
      %vm378 = vcmask 1041408
      %v380 = vsel %vm378, %v367, 0
      %v383 = vsel %vm378, %v368, 0
      %385 = vmatprep.subr.bf16.mxu0 %v366
      %386 = vmatpush1.bf16.msra.mxu0 %v365
      %387 = vmatprep.subr.bf16.mxu0 %v383
      %388 = vmatpush1.bf16.msra.mxu0 %v380
      %389 = vmatprep.subr.bf16.mxu0 0
      %390 = vmatpush1.bf16.msra.mxu0 0
      %391 = vmatprep.subr.bf16.mxu0 0
      %392 = vmatpush1.bf16.msra.mxu0 0
      %393 = vmatprep.subr.bf16.mxu0 0
      %394 = vmatpush1.bf16.msra.mxu0 0
      %395 = vmatprep.subr.bf16.mxu0 0
      %396 = vmatpush1.bf16.msra.mxu0 0
      %397 = vmatprep.subr.bf16.mxu0 0
      %398 = vmatpush1.bf16.msra.mxu0 0
      %399 = vmatprep.subr.bf16.mxu0 0
      %400 = vmatpush1.bf16.msra.mxu0 0
      %401 = vmatprep.subr.bf16.mxu0 0
      %402 = vmatpush1.bf16.msra.mxu0 0
      %403 = vmatprep.subr.bf16.mxu0 0
      %404 = vmatpush1.bf16.msra.mxu0 0
      %405 = vmatprep.subr.bf16.mxu0 0
      %406 = vmatpush1.bf16.msra.mxu0 0
      %407 = vmatprep.subr.bf16.mxu0 0
      %408 = vmatpush1.bf16.msra.mxu0 0
      %409 = vmatprep.subr.bf16.mxu0 0
      %410 = vmatpush1.bf16.msra.mxu0 0
      %411 = vmatprep.subr.bf16.mxu0 0
      %412 = vmatpush1.bf16.msra.mxu0 0
      %413 = vmatprep.subr.bf16.mxu0 0
      %414 = vmatpush1.bf16.msra.mxu0 0
      %415 = vmatprep.subr.bf16.mxu0 0
      %416 = vmatpush1.bf16.msra.mxu0 0
      %417 = vmatprep.mubr.bf16.mxu0 0
      %418 = vmatmul.mubr.bf16.gmra.mrb[0].mxu0 %v373
      %v419 = vpop.f32.mrb[0].mxu0
      %v420 = vadd.f32 0.0, %v419
      %v421 = vpop.f32.mrb[0].mxu0
      %v422 = vadd.f32 0.0, %v421
      %v423 = vpop.f32.mrb[0].mxu0
      %v424 = vadd.f32 0.0, %v423
      %v425 = vpop.f32.mrb[0].mxu0
      %v426 = vadd.f32 0.0, %v425
      %427 = vmatprep.mubr.bf16.mxu0 0
      %428 = vmatmul.mubr.bf16.gmra.mrb[0].mxu0 %v376
      %v429 = vpop.f32.mrb[0].mxu0
      %v430 = vadd.f32 0.0, %v429
      %v431 = vpop.f32.mrb[0].mxu0
      %v432 = vadd.f32 0.0, %v431
      %v433 = vpop.f32.mrb[0].mxu0
      %v434 = vpop.f32.mrb[0].mxu0
      %435 = vdwg.mxu0
      %v436 = vmax.f32 %v420, 0.0
      %v437 = vmax.f32 %v422, 0.0
      %v438 = vmax.f32 %v424, 0.0
      %v439 = vmax.f32 %v426, 0.0
      %v440 = vmax.f32 %v430, 0.0
      %v441 = vmax.f32 %v432, 0.0
      %s442 = scalar_lea.vmem %s332, 24
      %v443 = vld [vmem:[%s442] sm:$0xff]
      %v444 = vld [vmem:[%s442 + $0x8] sm:$0xff]
      %v445 = vld [vmem:[%s442 + $0x10] sm:$0x33]
      %v449 = vunpack.c.l.b16 %v443
      %v450 = vunpack.c.h.b16 %v443
      %v451 = vunpack.c.l.b16 %v444
      %v452 = vunpack.c.h.b16 %v444
      %v453 = vunpack.c.l.b16 %v445
      %v454 = vunpack.c.h.b16 %v445
      %v455 = vpack.c.b16 %v451, %v449
      %v456 = vpack.c.b16 %v452, %v450
      %v457 = vpack.c.b16 %v453, %v453
      %v458 = vpack.c.b16 %v454, %v454
      %v462 = vsel %vm378, %v457, 0
      %v465 = vsel %vm378, %v458, 0
      %467 = vmatprep.subr.bf16.mxu0 %v456
      %468 = vmatpush1.bf16.msra.mxu0 %v455
      %469 = vmatprep.subr.bf16.mxu0 %v465
      %470 = vmatpush1.bf16.msra.mxu0 %v462
      %471 = vmatprep.subr.bf16.mxu0 0
      %472 = vmatpush1.bf16.msra.mxu0 0
      %473 = vmatprep.subr.bf16.mxu0 0
      %474 = vmatpush1.bf16.msra.mxu0 0
      %475 = vmatprep.subr.bf16.mxu0 0
      %476 = vmatpush1.bf16.msra.mxu0 0
      %477 = vmatprep.subr.bf16.mxu0 0
      %478 = vmatpush1.bf16.msra.mxu0 0
      %479 = vmatprep.subr.bf16.mxu0 0
      %480 = vmatpush1.bf16.msra.mxu0 0
      %481 = vmatprep.subr.bf16.mxu0 0
      %482 = vmatpush1.bf16.msra.mxu0 0
      %483 = vmatprep.subr.bf16.mxu0 0
      %484 = vmatpush1.bf16.msra.mxu0 0
      %485 = vmatprep.subr.bf16.mxu0 0
      %486 = vmatpush1.bf16.msra.mxu0 0
      %487 = vmatprep.subr.bf16.mxu0 0
      %488 = vmatpush1.bf16.msra.mxu0 0
      %489 = vmatprep.subr.bf16.mxu0 0
      %490 = vmatpush1.bf16.msra.mxu0 0
      %491 = vmatprep.subr.bf16.mxu0 0
      %492 = vmatpush1.bf16.msra.mxu0 0
      %493 = vmatprep.subr.bf16.mxu0 0
      %494 = vmatpush1.bf16.msra.mxu0 0
      %495 = vmatprep.subr.bf16.mxu0 0
      %496 = vmatpush1.bf16.msra.mxu0 0
      %497 = vmatprep.subr.bf16.mxu0 0
      %498 = vmatpush1.bf16.msra.mxu0 0
      %499 = vmatprep.mubr.bf16.mxu0 0
      %500 = vmatmul.mubr.bf16.gmra.mrb[0].mxu0 %v373
      %v501 = vpop.f32.mrb[0].mxu0
      %v502 = vadd.f32 0.0, %v501
      %v503 = vpop.f32.mrb[0].mxu0
      %v504 = vadd.f32 0.0, %v503
      %v505 = vpop.f32.mrb[0].mxu0
      %v506 = vadd.f32 0.0, %v505
      %v507 = vpop.f32.mrb[0].mxu0
      %v508 = vadd.f32 0.0, %v507
      %509 = vmatprep.mubr.bf16.mxu0 0
      %510 = vmatmul.mubr.bf16.gmra.mrb[0].mxu0 %v376
      %v511 = vpop.f32.mrb[0].mxu0
      %v512 = vadd.f32 0.0, %v511
      %v513 = vpop.f32.mrb[0].mxu0
      %v514 = vadd.f32 0.0, %v513
      %v515 = vpop.f32.mrb[0].mxu0
      %v516 = vpop.f32.mrb[0].mxu0
      %517 = vdwg.mxu0
      %v518 = vmax.f32 %v502, 0.0
      %v519 = vmax.f32 %v504, 0.0
      %v520 = vmax.f32 %v506, 0.0
      %v521 = vmax.f32 %v508, 0.0
      %v522 = vmax.f32 %v512, 0.0
      %v523 = vmax.f32 %v514, 0.0
      %v524 = vpack.c.bf16 %v438, %v436
      %v525 = vpack.c.bf16 %v439, %v437
      %v526 = vpack.c.bf16 %v518, %v440
      %v527 = vpack.c.bf16 %v519, %v441
      %v528 = vpack.c.bf16 %v522, %v520
      %v529 = vpack.c.bf16 %v523, %v521
      %v530 = vld [vmem:[%s2] sm:$0xff]
      %v531 = vld [vmem:[%s2 + $0x8] sm:$0xff]
      %v532 = vld [vmem:[%s2 + $0x10] sm:$0xff]
      %v533 = vld [vmem:[%s2 + $0x18] sm:$0xff]
      %v534 = vld [vmem:[%s2 + $0x20] sm:$0xff]
      %v535 = vld [vmem:[%s2 + $0x28] sm:$0xff]
      %v536 = vld [vmem:[%s2 + $0x30] sm:$0xff]
      %v537 = vld [vmem:[%s2 + $0x38] sm:$0xff]
      %v538 = vld [vmem:[%s2 + $0x40] sm:$0xff]
      %v539 = vld [vmem:[%s2 + $0x48] sm:$0xff]
      %v540 = vld [vmem:[%s2 + $0x50] sm:$0xff]
      %v541 = vld [vmem:[%s2 + $0x58] sm:$0xff]
      %v542 = vld [vmem:[%s2 + $0x60] sm:$0xff]
      %v543 = vld [vmem:[%s2 + $0x68] sm:$0xff]
      %v544 = vld [vmem:[%s2 + $0x70] sm:$0xff]
      %v545 = vld [vmem:[%s2 + $0x78] sm:$0xff]
      %v546 = vld [vmem:[%s2 + $0x80] sm:$0xff]
      %v547 = vld [vmem:[%s2 + $0x88] sm:$0xff]
      %v548 = vld [vmem:[%s2 + $0x90] sm:$0xff]
      %v549 = vld [vmem:[%s2 + $0x98] sm:$0xff]
      %v550 = vld [vmem:[%s2 + $0xa0] sm:$0xff]
      %v551 = vld [vmem:[%s2 + $0xa8] sm:$0xff]
      %v552 = vld [vmem:[%s2 + $0xb0] sm:$0xff]
      %v553 = vld [vmem:[%s2 + $0xb8] sm:$0xff]
      %v554 = vld [vmem:[%s2 + $0xc0] sm:$0xff]
      %v555 = vld [vmem:[%s2 + $0xc8] sm:$0xff]
      %v556 = vld [vmem:[%s2 + $0xd0] sm:$0xff]
      %v557 = vld [vmem:[%s2 + $0xd8] sm:$0xff]
      %v558 = vld [vmem:[%s2 + $0xe0] sm:$0xff]
      %v559 = vld [vmem:[%s2 + $0xe8] sm:$0xff]
      %v560 = vld [vmem:[%s2 + $0xf0] sm:$0xff]
      %v561 = vld [vmem:[%s2 + $0xf8] sm:$0xff]
      %v594 = vunpack.c.l.b16 %v530
      %v595 = vunpack.c.h.b16 %v530
      %v596 = vunpack.c.l.b16 %v531
      %v597 = vunpack.c.h.b16 %v531
      %v598 = vunpack.c.l.b16 %v532
      %v599 = vunpack.c.h.b16 %v532
      %v600 = vunpack.c.l.b16 %v533
      %v601 = vunpack.c.h.b16 %v533
      %v602 = vunpack.c.l.b16 %v534
      %v603 = vunpack.c.h.b16 %v534
      %v604 = vunpack.c.l.b16 %v535
      %v605 = vunpack.c.h.b16 %v535
      %v606 = vunpack.c.l.b16 %v536
      %v607 = vunpack.c.h.b16 %v536
      %v608 = vunpack.c.l.b16 %v537
      %v609 = vunpack.c.h.b16 %v537
      %v610 = vunpack.c.l.b16 %v538
      %v611 = vunpack.c.h.b16 %v538
      %v612 = vunpack.c.l.b16 %v539
      %v613 = vunpack.c.h.b16 %v539
      %v614 = vunpack.c.l.b16 %v540
      %v615 = vunpack.c.h.b16 %v540
      %v616 = vunpack.c.l.b16 %v541
      %v617 = vunpack.c.h.b16 %v541
      %v618 = vunpack.c.l.b16 %v542
      %v619 = vunpack.c.h.b16 %v542
      %v620 = vunpack.c.l.b16 %v543
      %v621 = vunpack.c.h.b16 %v543
      %v622 = vunpack.c.l.b16 %v544
      %v623 = vunpack.c.h.b16 %v544
      %v624 = vunpack.c.l.b16 %v545
      %v625 = vunpack.c.h.b16 %v545
      %v626 = vunpack.c.l.b16 %v546
      %v627 = vunpack.c.h.b16 %v546
      %v628 = vunpack.c.l.b16 %v547
      %v629 = vunpack.c.h.b16 %v547
      %v630 = vunpack.c.l.b16 %v548
      %v631 = vunpack.c.h.b16 %v548
      %v632 = vunpack.c.l.b16 %v549
      %v633 = vunpack.c.h.b16 %v549
      %v634 = vunpack.c.l.b16 %v550
      %v635 = vunpack.c.h.b16 %v550
      %v636 = vunpack.c.l.b16 %v551
      %v637 = vunpack.c.h.b16 %v551
      %v638 = vunpack.c.l.b16 %v552
      %v639 = vunpack.c.h.b16 %v552
      %v640 = vunpack.c.l.b16 %v553
      %v641 = vunpack.c.h.b16 %v553
      %v642 = vunpack.c.l.b16 %v554
      %v643 = vunpack.c.h.b16 %v554
      %v644 = vunpack.c.l.b16 %v555
      %v645 = vunpack.c.h.b16 %v555
      %v646 = vunpack.c.l.b16 %v556
      %v647 = vunpack.c.h.b16 %v556
      %v648 = vunpack.c.l.b16 %v557
      %v649 = vunpack.c.h.b16 %v557
      %v650 = vunpack.c.l.b16 %v558
      %v651 = vunpack.c.h.b16 %v558
      %v652 = vunpack.c.l.b16 %v559
      %v653 = vunpack.c.h.b16 %v559
      %v654 = vunpack.c.l.b16 %v560
      %v655 = vunpack.c.h.b16 %v560
      %v656 = vunpack.c.l.b16 %v561
      %v657 = vunpack.c.h.b16 %v561
      %v658 = vpack.c.b16 %v596, %v594
      %v659 = vpack.c.b16 %v597, %v595
      %v660 = vpack.c.b16 %v600, %v598
      %v661 = vpack.c.b16 %v601, %v599
      %v662 = vpack.c.b16 %v604, %v602
      %v663 = vpack.c.b16 %v605, %v603
      %v664 = vpack.c.b16 %v608, %v606
      %v665 = vpack.c.b16 %v609, %v607
      %v666 = vpack.c.b16 %v612, %v610
      %v667 = vpack.c.b16 %v613, %v611
      %v668 = vpack.c.b16 %v616, %v614
      %v669 = vpack.c.b16 %v617, %v615
      %v670 = vpack.c.b16 %v620, %v618
      %v671 = vpack.c.b16 %v621, %v619
      %v672 = vpack.c.b16 %v624, %v622
      %v673 = vpack.c.b16 %v625, %v623
      %v674 = vpack.c.b16 %v628, %v626
      %v675 = vpack.c.b16 %v629, %v627
      %v676 = vpack.c.b16 %v632, %v630
      %v677 = vpack.c.b16 %v633, %v631
      %v678 = vpack.c.b16 %v636, %v634
      %v679 = vpack.c.b16 %v637, %v635
      %v680 = vpack.c.b16 %v640, %v638
      %v681 = vpack.c.b16 %v641, %v639
      %v682 = vpack.c.b16 %v644, %v642
      %v683 = vpack.c.b16 %v645, %v643
      %v684 = vpack.c.b16 %v648, %v646
      %v685 = vpack.c.b16 %v649, %v647
      %v686 = vpack.c.b16 %v652, %v650
      %v687 = vpack.c.b16 %v653, %v651
      %v688 = vpack.c.b16 %v656, %v654
      %v689 = vpack.c.b16 %v657, %v655
      %722 = vmatprep.subr.bf16.mxu0 %v659
      %723 = vmatpush1.bf16.msra.mxu0 %v658
      %724 = vmatprep.subr.bf16.mxu0 %v661
      %725 = vmatpush1.bf16.msra.mxu0 %v660
      %726 = vmatprep.subr.bf16.mxu0 %v663
      %727 = vmatpush1.bf16.msra.mxu0 %v662
      %728 = vmatprep.subr.bf16.mxu0 %v665
      %729 = vmatpush1.bf16.msra.mxu0 %v664
      %730 = vmatprep.subr.bf16.mxu0 %v667
      %731 = vmatpush1.bf16.msra.mxu0 %v666
      %732 = vmatprep.subr.bf16.mxu0 %v669
      %733 = vmatpush1.bf16.msra.mxu0 %v668
      %734 = vmatprep.subr.bf16.mxu0 %v671
      %735 = vmatpush1.bf16.msra.mxu0 %v670
      %736 = vmatprep.subr.bf16.mxu0 %v673
      %737 = vmatpush1.bf16.msra.mxu0 %v672
      %738 = vmatprep.subr.bf16.mxu0 %v675
      %739 = vmatpush1.bf16.msra.mxu0 %v674
      %740 = vmatprep.subr.bf16.mxu0 %v677
      %741 = vmatpush1.bf16.msra.mxu0 %v676
      %742 = vmatprep.subr.bf16.mxu0 %v679
      %743 = vmatpush1.bf16.msra.mxu0 %v678
      %744 = vmatprep.subr.bf16.mxu0 %v681
      %745 = vmatpush1.bf16.msra.mxu0 %v680
      %746 = vmatprep.subr.bf16.mxu0 %v683
      %747 = vmatpush1.bf16.msra.mxu0 %v682
      %748 = vmatprep.subr.bf16.mxu0 %v685
      %749 = vmatpush1.bf16.msra.mxu0 %v684
      %750 = vmatprep.subr.bf16.mxu0 %v687
      %751 = vmatpush1.bf16.msra.mxu0 %v686
      %752 = vmatprep.subr.bf16.mxu0 %v689
      %753 = vmatpush1.bf16.msra.mxu0 %v688
      %754 = vmatprep.mubr.bf16.mxu0 %v525
      %755 = vmatmul.mubr.bf16.gmra.mrb[0].mxu0 %v524
      %v756 = vpop.f32.mrb[0].mxu0
      %v757 = vadd.f32 0.0, %v756
      %v758 = vpop.f32.mrb[0].mxu0
      %v759 = vadd.f32 0.0, %v758
      %v760 = vpop.f32.mrb[0].mxu0
      %v761 = vadd.f32 0.0, %v760
      %v762 = vpop.f32.mrb[0].mxu0
      %v763 = vadd.f32 0.0, %v762
      %764 = vmatprep.mubr.bf16.mxu0 %v527
      %765 = vmatmul.mubr.bf16.gmra.mrb[0].mxu0 %v526
      %v766 = vpop.f32.mrb[0].mxu0
      %v767 = vadd.f32 0.0, %v766
      %v768 = vpop.f32.mrb[0].mxu0
      %v769 = vadd.f32 0.0, %v768
      %v770 = vpop.f32.mrb[0].mxu0
      %v771 = vadd.f32 0.0, %v770
      %v772 = vpop.f32.mrb[0].mxu0
      %v773 = vadd.f32 0.0, %v772
      %774 = vmatprep.mubr.bf16.mxu0 %v529
      %775 = vmatmul.mubr.bf16.gmra.mrb[0].mxu0 %v528
      %v776 = vpop.f32.mrb[0].mxu0
      %v777 = vadd.f32 0.0, %v776
      %v778 = vpop.f32.mrb[0].mxu0
      %v779 = vadd.f32 0.0, %v778
      %v780 = vpop.f32.mrb[0].mxu0
      %v781 = vadd.f32 0.0, %v780
      %v782 = vpop.f32.mrb[0].mxu0
      %v783 = vadd.f32 0.0, %v782
      %784 = vdwg.mxu0
      %v785 = vld [vmem:[%s3] sm:$0xff]
      %v786 = vld [vmem:[%s3 + $0x8] sm:$0xff]
      %v787 = vld [vmem:[%s3 + $0x10] sm:$0xff]
      %v788 = vld [vmem:[%s3 + $0x18] sm:$0xff]
      %v789 = vld [vmem:[%s3 + $0x20] sm:$0xff]
      %v790 = vld [vmem:[%s3 + $0x28] sm:$0xff]
      %v791 = vld [vmem:[%s3 + $0x30] sm:$0xff]
      %v792 = vld [vmem:[%s3 + $0x38] sm:$0xff]
      %v793 = vld [vmem:[%s3 + $0x40] sm:$0xff]
      %v794 = vld [vmem:[%s3 + $0x48] sm:$0xff]
      %v795 = vld [vmem:[%s3 + $0x50] sm:$0xff]
      %v796 = vld [vmem:[%s3 + $0x58] sm:$0xff]
      %v797 = vld [vmem:[%s3 + $0x60] sm:$0xff]
      %v798 = vld [vmem:[%s3 + $0x68] sm:$0xff]
      %v799 = vld [vmem:[%s3 + $0x70] sm:$0xff]
      %v800 = vld [vmem:[%s3 + $0x78] sm:$0xff]
      %v801 = vld [vmem:[%s3 + $0x80] sm:$0xff]
      %v802 = vld [vmem:[%s3 + $0x88] sm:$0xff]
      %v803 = vld [vmem:[%s3 + $0x90] sm:$0xff]
      %v804 = vld [vmem:[%s3 + $0x98] sm:$0xff]
      %v805 = vld [vmem:[%s3 + $0xa0] sm:$0xff]
      %v806 = vld [vmem:[%s3 + $0xa8] sm:$0xff]
      %v807 = vld [vmem:[%s3 + $0xb0] sm:$0xff]
      %v808 = vld [vmem:[%s3 + $0xb8] sm:$0xff]
      %v809 = vld [vmem:[%s3 + $0xc0] sm:$0xff]
      %v810 = vld [vmem:[%s3 + $0xc8] sm:$0xff]
      %v811 = vld [vmem:[%s3 + $0xd0] sm:$0xff]
      %v812 = vld [vmem:[%s3 + $0xd8] sm:$0xff]
      %v813 = vld [vmem:[%s3 + $0xe0] sm:$0xff]
      %v814 = vld [vmem:[%s3 + $0xe8] sm:$0xff]
      %v815 = vld [vmem:[%s3 + $0xf0] sm:$0xff]
      %v816 = vld [vmem:[%s3 + $0xf8] sm:$0xff]
      %v849 = vunpack.c.l.b16 %v785
      %v850 = vunpack.c.h.b16 %v785
      %v851 = vunpack.c.l.b16 %v786
      %v852 = vunpack.c.h.b16 %v786
      %v853 = vunpack.c.l.b16 %v787
      %v854 = vunpack.c.h.b16 %v787
      %v855 = vunpack.c.l.b16 %v788
      %v856 = vunpack.c.h.b16 %v788
      %v857 = vunpack.c.l.b16 %v789
      %v858 = vunpack.c.h.b16 %v789
      %v859 = vunpack.c.l.b16 %v790
      %v860 = vunpack.c.h.b16 %v790
      %v861 = vunpack.c.l.b16 %v791
      %v862 = vunpack.c.h.b16 %v791
      %v863 = vunpack.c.l.b16 %v792
      %v864 = vunpack.c.h.b16 %v792
      %v865 = vunpack.c.l.b16 %v793
      %v866 = vunpack.c.h.b16 %v793
      %v867 = vunpack.c.l.b16 %v794
      %v868 = vunpack.c.h.b16 %v794
      %v869 = vunpack.c.l.b16 %v795
      %v870 = vunpack.c.h.b16 %v795
      %v871 = vunpack.c.l.b16 %v796
      %v872 = vunpack.c.h.b16 %v796
      %v873 = vunpack.c.l.b16 %v797
      %v874 = vunpack.c.h.b16 %v797
      %v875 = vunpack.c.l.b16 %v798
      %v876 = vunpack.c.h.b16 %v798
      %v877 = vunpack.c.l.b16 %v799
      %v878 = vunpack.c.h.b16 %v799
      %v879 = vunpack.c.l.b16 %v800
      %v880 = vunpack.c.h.b16 %v800
      %v881 = vunpack.c.l.b16 %v801
      %v882 = vunpack.c.h.b16 %v801
      %v883 = vunpack.c.l.b16 %v802
      %v884 = vunpack.c.h.b16 %v802
      %v885 = vunpack.c.l.b16 %v803
      %v886 = vunpack.c.h.b16 %v803
      %v887 = vunpack.c.l.b16 %v804
      %v888 = vunpack.c.h.b16 %v804
      %v889 = vunpack.c.l.b16 %v805
      %v890 = vunpack.c.h.b16 %v805
      %v891 = vunpack.c.l.b16 %v806
      %v892 = vunpack.c.h.b16 %v806
      %v893 = vunpack.c.l.b16 %v807
      %v894 = vunpack.c.h.b16 %v807
      %v895 = vunpack.c.l.b16 %v808
      %v896 = vunpack.c.h.b16 %v808
      %v897 = vunpack.c.l.b16 %v809
      %v898 = vunpack.c.h.b16 %v809
      %v899 = vunpack.c.l.b16 %v810
      %v900 = vunpack.c.h.b16 %v810
      %v901 = vunpack.c.l.b16 %v811
      %v902 = vunpack.c.h.b16 %v811
      %v903 = vunpack.c.l.b16 %v812
      %v904 = vunpack.c.h.b16 %v812
      %v905 = vunpack.c.l.b16 %v813
      %v906 = vunpack.c.h.b16 %v813
      %v907 = vunpack.c.l.b16 %v814
      %v908 = vunpack.c.h.b16 %v814
      %v909 = vunpack.c.l.b16 %v815
      %v910 = vunpack.c.h.b16 %v815
      %v911 = vunpack.c.l.b16 %v816
      %v912 = vunpack.c.h.b16 %v816
      %v913 = vpack.c.b16 %v851, %v849
      %v914 = vpack.c.b16 %v852, %v850
      %v915 = vpack.c.b16 %v855, %v853
      %v916 = vpack.c.b16 %v856, %v854
      %v917 = vpack.c.b16 %v859, %v857
      %v918 = vpack.c.b16 %v860, %v858
      %v919 = vpack.c.b16 %v863, %v861
      %v920 = vpack.c.b16 %v864, %v862
      %v921 = vpack.c.b16 %v867, %v865
      %v922 = vpack.c.b16 %v868, %v866
      %v923 = vpack.c.b16 %v871, %v869
      %v924 = vpack.c.b16 %v872, %v870
      %v925 = vpack.c.b16 %v875, %v873
      %v926 = vpack.c.b16 %v876, %v874
      %v927 = vpack.c.b16 %v879, %v877
      %v928 = vpack.c.b16 %v880, %v878
      %v929 = vpack.c.b16 %v883, %v881
      %v930 = vpack.c.b16 %v884, %v882
      %v931 = vpack.c.b16 %v887, %v885
      %v932 = vpack.c.b16 %v888, %v886
      %v933 = vpack.c.b16 %v891, %v889
      %v934 = vpack.c.b16 %v892, %v890
      %v935 = vpack.c.b16 %v895, %v893
      %v936 = vpack.c.b16 %v896, %v894
      %v937 = vpack.c.b16 %v899, %v897
      %v938 = vpack.c.b16 %v900, %v898
      %v939 = vpack.c.b16 %v903, %v901
      %v940 = vpack.c.b16 %v904, %v902
      %v941 = vpack.c.b16 %v907, %v905
      %v942 = vpack.c.b16 %v908, %v906
      %v943 = vpack.c.b16 %v911, %v909
      %v944 = vpack.c.b16 %v912, %v910
      %977 = vmatprep.subr.bf16.mxu0 %v914
      %978 = vmatpush1.bf16.msra.mxu0 %v913
      %979 = vmatprep.subr.bf16.mxu0 %v916
      %980 = vmatpush1.bf16.msra.mxu0 %v915
      %981 = vmatprep.subr.bf16.mxu0 %v918
      %982 = vmatpush1.bf16.msra.mxu0 %v917
      %983 = vmatprep.subr.bf16.mxu0 %v920
      %984 = vmatpush1.bf16.msra.mxu0 %v919
      %985 = vmatprep.subr.bf16.mxu0 %v922
      %986 = vmatpush1.bf16.msra.mxu0 %v921
      %987 = vmatprep.subr.bf16.mxu0 %v924
      %988 = vmatpush1.bf16.msra.mxu0 %v923
      %989 = vmatprep.subr.bf16.mxu0 %v926
      %990 = vmatpush1.bf16.msra.mxu0 %v925
      %991 = vmatprep.subr.bf16.mxu0 %v928
      %992 = vmatpush1.bf16.msra.mxu0 %v927
      %993 = vmatprep.subr.bf16.mxu0 %v930
      %994 = vmatpush1.bf16.msra.mxu0 %v929
      %995 = vmatprep.subr.bf16.mxu0 %v932
      %996 = vmatpush1.bf16.msra.mxu0 %v931
      %997 = vmatprep.subr.bf16.mxu0 %v934
      %998 = vmatpush1.bf16.msra.mxu0 %v933
      %999 = vmatprep.subr.bf16.mxu0 %v936
      %1000 = vmatpush1.bf16.msra.mxu0 %v935
      %1001 = vmatprep.subr.bf16.mxu0 %v938
      %1002 = vmatpush1.bf16.msra.mxu0 %v937
      %1003 = vmatprep.subr.bf16.mxu0 %v940
      %1004 = vmatpush1.bf16.msra.mxu0 %v939
      %1005 = vmatprep.subr.bf16.mxu0 %v942
      %1006 = vmatpush1.bf16.msra.mxu0 %v941
      %1007 = vmatprep.subr.bf16.mxu0 %v944
      %1008 = vmatpush1.bf16.msra.mxu0 %v943
      %1009 = vmatprep.mubr.bf16.mxu0 %v525
      %1010 = vmatmul.mubr.bf16.gmra.mrb[0].mxu0 %v524
      %v1011 = vpop.f32.mrb[0].mxu0
      %v1012 = vadd.f32 0.0, %v1011
      %v1013 = vpop.f32.mrb[0].mxu0
      %v1014 = vadd.f32 0.0, %v1013
      %v1015 = vpop.f32.mrb[0].mxu0
      %v1016 = vadd.f32 0.0, %v1015
      %v1017 = vpop.f32.mrb[0].mxu0
      %v1018 = vadd.f32 0.0, %v1017
      %1019 = vmatprep.mubr.bf16.mxu0 %v527
      %1020 = vmatmul.mubr.bf16.gmra.mrb[0].mxu0 %v526
      %v1021 = vpop.f32.mrb[0].mxu0
      %v1022 = vadd.f32 0.0, %v1021
      %v1023 = vpop.f32.mrb[0].mxu0
      %v1024 = vadd.f32 0.0, %v1023
      %v1025 = vpop.f32.mrb[0].mxu0
      %v1026 = vadd.f32 0.0, %v1025
      %v1027 = vpop.f32.mrb[0].mxu0
      %v1028 = vadd.f32 0.0, %v1027
      %1029 = vmatprep.mubr.bf16.mxu0 %v529
      %1030 = vmatmul.mubr.bf16.gmra.mrb[0].mxu0 %v528
      %v1031 = vpop.f32.mrb[0].mxu0
      %v1032 = vadd.f32 0.0, %v1031
      %v1033 = vpop.f32.mrb[0].mxu0
      %v1034 = vadd.f32 0.0, %v1033
      %v1035 = vpop.f32.mrb[0].mxu0
      %v1036 = vadd.f32 0.0, %v1035
      %v1037 = vpop.f32.mrb[0].mxu0
      %v1038 = vadd.f32 0.0, %v1037
      %1039 = vdwg.mxu0
      %v1040 = vpack.c.bf16 %v761, %v757
      %v1041 = vpack.c.bf16 %v763, %v759
      %v1042 = vpack.c.bf16 %v771, %v767
      %v1043 = vpack.c.bf16 %v773, %v769
      %v1044 = vpack.c.bf16 %v781, %v777
      %v1045 = vpack.c.bf16 %v783, %v779
      %v1046 = vpack.c.bf16 %v1016, %v1012
      %v1047 = vpack.c.bf16 %v1018, %v1014
      %v1048 = vpack.c.bf16 %v1026, %v1022
      %v1049 = vpack.c.bf16 %v1028, %v1024
      %v1050 = vpack.c.bf16 %v1036, %v1032
      %v1051 = vpack.c.bf16 %v1038, %v1034
      %v1052 = vld [vmem:[%s4] sm:$0xf]
      %v1053 = vld [vmem:[%s4 + $0x4] sm:$0xf]
      %v1054 = vld [vmem:[%s4 + $0x8] sm:$0xf]
      %v1055 = vld [vmem:[%s4 + $0xc] sm:$0xf]
      %v1056 = vld [vmem:[%s4 + $0x10] sm:$0xf]
      %v1057 = vld [vmem:[%s4 + $0x14] sm:$0xf]
      %v1058 = vld [vmem:[%s4 + $0x18] sm:$0xf]
      %v1059 = vld [vmem:[%s4 + $0x1c] sm:$0xf]
      %v1060 = vld [vmem:[%s4 + $0x20] sm:$0xf]
      %v1061 = vld [vmem:[%s4 + $0x24] sm:$0xf]
      %v1062 = vld [vmem:[%s4 + $0x28] sm:$0xf]
      %v1063 = vld [vmem:[%s4 + $0x2c] sm:$0xf]
      %v1064 = vld [vmem:[%s5] sm:$0xff]
      %v1065 = vld [vmem:[%s5 + $0x8] sm:$0xff]
      %v1066 = vld [vmem:[%s5 + $0x10] sm:$0xff]
      %v1067 = vld [vmem:[%s5 + $0x18] sm:$0xff]
      %v1068 = vld [vmem:[%s5 + $0x20] sm:$0xff]
      %v1069 = vld [vmem:[%s5 + $0x28] sm:$0xff]
      %v1070 = vld [vmem:[%s5 + $0x30] sm:$0xff]
      %v1071 = vld [vmem:[%s5 + $0x38] sm:$0xff]
      %v1072 = vld [vmem:[%s5 + $0x40] sm:$0xff]
      %v1073 = vld [vmem:[%s5 + $0x48] sm:$0xff]
      %v1074 = vld [vmem:[%s5 + $0x50] sm:$0xff]
      %v1075 = vld [vmem:[%s5 + $0x58] sm:$0xff]
      %1077 = vset.pattern.permute.xlu0 0
      %1078 = vperm.xlu0 %1077, %v1064
      %v1079 = vpop.permute.xlu0 %1078
      %1082 = vset.pattern.permute.xlu0 0
      %1083 = vperm.xlu0 %1082, %v1065
      %v1084 = vpop.permute.xlu0 %1083
      %1087 = vset.pattern.permute.xlu0 0
      %1088 = vperm.xlu0 %1087, %v1066
      %v1089 = vpop.permute.xlu0 %1088
      %1092 = vset.pattern.permute.xlu0 0
      %1093 = vperm.xlu0 %1092, %v1067
      %v1094 = vpop.permute.xlu0 %1093
      %1097 = vset.pattern.permute.xlu0 0
      %1098 = vperm.xlu0 %1097, %v1068
      %v1099 = vpop.permute.xlu0 %1098
      %1102 = vset.pattern.permute.xlu0 0
      %1103 = vperm.xlu0 %1102, %v1069
      %v1104 = vpop.permute.xlu0 %1103
      %1107 = vset.pattern.permute.xlu0 0
      %1108 = vperm.xlu0 %1107, %v1070
      %v1109 = vpop.permute.xlu0 %1108
      %1112 = vset.pattern.permute.xlu0 0
      %1113 = vperm.xlu0 %1112, %v1071
      %v1114 = vpop.permute.xlu0 %1113
      %1117 = vset.pattern.permute.xlu0 0
      %1118 = vperm.xlu0 %1117, %v1072
      %v1119 = vpop.permute.xlu0 %1118
      %1122 = vset.pattern.permute.xlu0 0
      %1123 = vperm.xlu0 %1122, %v1073
      %v1124 = vpop.permute.xlu0 %1123
      %1127 = vset.pattern.permute.xlu0 0
      %1128 = vperm.xlu0 %1127, %v1074
      %v1129 = vpop.permute.xlu0 %1128
      %1132 = vset.pattern.permute.xlu0 0
      %1133 = vperm.xlu0 %1132, %v1075
      %v1134 = vpop.permute.xlu0 %1133
      %v1148 = vunpack.c.l.b16 %v1052
      %v1149 = vunpack.c.l.b16 %v1053
      %v1150 = vunpack.c.l.b16 %v1054
      %v1151 = vunpack.c.l.b16 %v1055
      %v1152 = vunpack.c.l.b16 %v1056
      %v1153 = vunpack.c.l.b16 %v1057
      %v1154 = vunpack.c.l.b16 %v1058
      %v1155 = vunpack.c.l.b16 %v1059
      %v1156 = vunpack.c.l.b16 %v1060
      %v1157 = vunpack.c.l.b16 %v1061
      %v1158 = vunpack.c.l.b16 %v1062
      %v1159 = vunpack.c.l.b16 %v1063
      %v1160 = vpack.c.b16 %v1149, %v1148
      %v1161 = vpack.c.b16 %v1151, %v1150
      %v1162 = vpack.c.b16 %v1153, %v1152
      %v1163 = vpack.c.b16 %v1155, %v1154
      %v1164 = vpack.c.b16 %v1157, %v1156
      %v1165 = vpack.c.b16 %v1159, %v1158
      %vm1166 = vcmask 785408
      %v1168 = vsel %vm1166, %v1160, 0
      %v1171 = vsel %vm1166, %v1161, 0
      %v1174 = vsel %vm1166, %v1162, 0
      %v1177 = vsel %vm1166, %v1163, 0
      %v1180 = vsel %vm1166, %v1164, 0
      %v1183 = vsel %vm1166, %v1165, 0
      %1185 = vmatprep.subr.bf16.mxu0 %v1041
      %1186 = vmatpush1.bf16.msra.mxu0 %v1040
      %1187 = vmatprep.subr.bf16.mxu0 %v1043
      %1188 = vmatpush1.bf16.msra.mxu0 %v1042
      %1189 = vmatprep.subr.bf16.mxu0 %v1045
      %1190 = vmatpush1.bf16.msra.mxu0 %v1044
      %1191 = vmatprep.subr.bf16.mxu0 %v1047
      %1192 = vmatpush1.bf16.msra.mxu0 %v1046
      %1193 = vmatprep.subr.bf16.mxu0 %v1049
      %1194 = vmatpush1.bf16.msra.mxu0 %v1048
      %1195 = vmatprep.subr.bf16.mxu0 %v1051
      %1196 = vmatpush1.bf16.msra.mxu0 %v1050
      %1197 = vmatprep.subr.bf16.mxu0 0
      %1198 = vmatpush1.bf16.msra.mxu0 0
      %1199 = vmatprep.subr.bf16.mxu0 0
      %1200 = vmatpush1.bf16.msra.mxu0 0
      %1201 = vmatprep.subr.bf16.mxu0 0
      %1202 = vmatpush1.bf16.msra.mxu0 0
      %1203 = vmatprep.subr.bf16.mxu0 0
      %1204 = vmatpush1.bf16.msra.mxu0 0
      %1205 = vmatprep.subr.bf16.mxu0 0
      %1206 = vmatpush1.bf16.msra.mxu0 0
      %1207 = vmatprep.subr.bf16.mxu0 0
      %1208 = vmatpush1.bf16.msra.mxu0 0
      %1209 = vmatprep.subr.bf16.mxu0 0
      %1210 = vmatpush1.bf16.msra.mxu0 0
      %1211 = vmatprep.subr.bf16.mxu0 0
      %1212 = vmatpush1.bf16.msra.mxu0 0
      %1213 = vmatprep.subr.bf16.mxu0 0
      %1214 = vmatpush1.bf16.msra.mxu0 0
      %1215 = vmatprep.subr.bf16.mxu0 0
      %1216 = vmatpush1.bf16.msra.mxu0 0
      %1217 = vmatprep.mubr.bf16.mxu0 0
      %1218 = vmatmul.mubr.bf16.gmra.mrb[0].mxu0 %v1168
      %v1219 = vpop.f32.mrb[0].mxu0
      %v1220 = vadd.f32 %v1079, %v1219
      %v1221 = vpop.f32.mrb[0].mxu0
      %v1222 = vadd.f32 %v1079, %v1221
      %v1223 = vpop.f32.mrb[0].mxu0
      %v1224 = vadd.f32 %v1084, %v1223
      %v1225 = vpop.f32.mrb[0].mxu0
      %v1226 = vadd.f32 %v1084, %v1225
      %1227 = vmatprep.mubr.bf16.mxu0 0
      %1228 = vmatmul.mubr.bf16.gmra.mrb[0].mxu0 %v1171
      %v1229 = vpop.f32.mrb[0].mxu0
      %v1230 = vadd.f32 %v1089, %v1229
      %v1231 = vpop.f32.mrb[0].mxu0
      %v1232 = vadd.f32 %v1089, %v1231
      %v1233 = vpop.f32.mrb[0].mxu0
      %v1234 = vadd.f32 %v1094, %v1233
      %v1235 = vpop.f32.mrb[0].mxu0
      %v1236 = vadd.f32 %v1094, %v1235
      %1237 = vmatprep.mubr.bf16.mxu0 0
      %1238 = vmatmul.mubr.bf16.gmra.mrb[0].mxu0 %v1174
      %v1239 = vpop.f32.mrb[0].mxu0
      %v1240 = vadd.f32 %v1099, %v1239
      %v1241 = vpop.f32.mrb[0].mxu0
      %v1242 = vadd.f32 %v1099, %v1241
      %v1243 = vpop.f32.mrb[0].mxu0
      %v1244 = vadd.f32 %v1104, %v1243
      %v1245 = vpop.f32.mrb[0].mxu0
      %v1246 = vadd.f32 %v1104, %v1245
      %1247 = vmatprep.mubr.bf16.mxu0 0
      %1248 = vmatmul.mubr.bf16.gmra.mrb[0].mxu0 %v1177
      %v1249 = vpop.f32.mrb[0].mxu0
      %v1250 = vadd.f32 %v1109, %v1249
      %v1251 = vpop.f32.mrb[0].mxu0
      %v1252 = vadd.f32 %v1109, %v1251
      %v1253 = vpop.f32.mrb[0].mxu0
      %v1254 = vadd.f32 %v1114, %v1253
      %v1255 = vpop.f32.mrb[0].mxu0
      %v1256 = vadd.f32 %v1114, %v1255
      %1257 = vmatprep.mubr.bf16.mxu0 0
      %1258 = vmatmul.mubr.bf16.gmra.mrb[0].mxu0 %v1180
      %v1259 = vpop.f32.mrb[0].mxu0
      %v1260 = vadd.f32 %v1119, %v1259
      %v1261 = vpop.f32.mrb[0].mxu0
      %v1262 = vadd.f32 %v1119, %v1261
      %v1263 = vpop.f32.mrb[0].mxu0
      %v1264 = vadd.f32 %v1124, %v1263
      %v1265 = vpop.f32.mrb[0].mxu0
      %v1266 = vadd.f32 %v1124, %v1265
      %1267 = vmatprep.mubr.bf16.mxu0 0
      %1268 = vmatmul.mubr.bf16.gmra.mrb[0].mxu0 %v1183
      %v1269 = vpop.f32.mrb[0].mxu0
      %v1270 = vadd.f32 %v1129, %v1269
      %v1271 = vpop.f32.mrb[0].mxu0
      %v1272 = vadd.f32 %v1129, %v1271
      %v1273 = vpop.f32.mrb[0].mxu0
      %v1274 = vadd.f32 %v1134, %v1273
      %v1275 = vpop.f32.mrb[0].mxu0
      %v1276 = vadd.f32 %v1134, %v1275
      %1277 = vdwg.mxu0
      %v1278 = vmax.f32 %v1220, 0.0
      %v1279 = vmax.f32 %v1222, 0.0
      %v1280 = vmax.f32 %v1224, 0.0
      %v1281 = vmax.f32 %v1226, 0.0
      %v1282 = vmax.f32 %v1230, 0.0
      %v1283 = vmax.f32 %v1232, 0.0
      %v1284 = vmax.f32 %v1234, 0.0
      %v1285 = vmax.f32 %v1236, 0.0
      %v1286 = vmax.f32 %v1240, 0.0
      %v1287 = vmax.f32 %v1242, 0.0
      %v1288 = vmax.f32 %v1244, 0.0
      %v1289 = vmax.f32 %v1246, 0.0
      %v1290 = vmax.f32 %v1250, 0.0
      %v1291 = vmax.f32 %v1252, 0.0
      %v1292 = vmax.f32 %v1254, 0.0
      %v1293 = vmax.f32 %v1256, 0.0
      %v1294 = vmax.f32 %v1260, 0.0
      %v1295 = vmax.f32 %v1262, 0.0
      %v1296 = vmax.f32 %v1264, 0.0
      %v1297 = vmax.f32 %v1266, 0.0
      %v1298 = vmax.f32 %v1270, 0.0
      %v1299 = vmax.f32 %v1272, 0.0
      %v1300 = vmax.f32 %v1274, 0.0
      %v1301 = vmax.f32 %v1276, 0.0
      %v1302 = vpack.c.bf16 %v1280, %v1278
      %v1303 = vpack.c.bf16 %v1281, %v1279
      %v1304 = vpack.c.bf16 %v1284, %v1282
      %v1305 = vpack.c.bf16 %v1285, %v1283
      %v1306 = vpack.c.bf16 %v1288, %v1286
      %v1307 = vpack.c.bf16 %v1289, %v1287
      %v1308 = vld [vmem:[%s6] sm:$0xff]
      %v1309 = vld [vmem:[%s6 + $0x8] sm:$0xff]
      %v1310 = vld [vmem:[%s6 + $0x10] sm:$0xff]
      %v1311 = vld [vmem:[%s6 + $0x18] sm:$0xff]
      %v1312 = vld [vmem:[%s6 + $0x20] sm:$0xff]
      %v1313 = vld [vmem:[%s6 + $0x28] sm:$0xff]
      %v1314 = vld [vmem:[%s6 + $0x30] sm:$0xff]
      %v1315 = vld [vmem:[%s6 + $0x38] sm:$0xff]
      %v1316 = vld [vmem:[%s6 + $0x40] sm:$0xff]
      %v1317 = vld [vmem:[%s6 + $0x48] sm:$0xff]
      %v1318 = vld [vmem:[%s6 + $0x50] sm:$0xff]
      %v1319 = vld [vmem:[%s6 + $0x58] sm:$0xff]
      %v1320 = vld [vmem:[%s6 + $0x60] sm:$0xff]
      %v1321 = vld [vmem:[%s6 + $0x68] sm:$0xff]
      %v1322 = vld [vmem:[%s6 + $0x70] sm:$0xff]
      %v1323 = vld [vmem:[%s6 + $0x78] sm:$0xff]
      %v1324 = vld [vmem:[%s6 + $0x80] sm:$0xff]
      %v1325 = vld [vmem:[%s6 + $0x88] sm:$0xff]
      %v1326 = vpack.c.bf16 %v1292, %v1290
      %v1327 = vpack.c.bf16 %v1293, %v1291
      %v1328 = vpack.c.bf16 %v1296, %v1294
      %v1329 = vpack.c.bf16 %v1297, %v1295
      %v1330 = vpack.c.bf16 %v1300, %v1298
      %v1331 = vpack.c.bf16 %v1301, %v1299
      %v1332 = vld [vmem:[%s7] sm:$0xff]
      %v1333 = vld [vmem:[%s7 + $0x8] sm:$0xff]
      %v1334 = vld [vmem:[%s7 + $0x10] sm:$0xff]
      %v1335 = vld [vmem:[%s7 + $0x18] sm:$0xff]
      %v1336 = vld [vmem:[%s7 + $0x20] sm:$0xff]
      %v1337 = vld [vmem:[%s7 + $0x28] sm:$0xff]
      %v1338 = vld [vmem:[%s7 + $0x30] sm:$0xff]
      %v1339 = vld [vmem:[%s7 + $0x38] sm:$0xff]
      %v1340 = vld [vmem:[%s7 + $0x40] sm:$0xff]
      %v1341 = vld [vmem:[%s7 + $0x48] sm:$0xff]
      %v1342 = vld [vmem:[%s7 + $0x50] sm:$0xff]
      %v1343 = vld [vmem:[%s7 + $0x58] sm:$0xff]
      %v1344 = vld [vmem:[%s7 + $0x60] sm:$0xff]
      %v1345 = vld [vmem:[%s7 + $0x68] sm:$0xff]
      %v1346 = vld [vmem:[%s7 + $0x70] sm:$0xff]
      %v1347 = vld [vmem:[%s7 + $0x78] sm:$0xff]
      %v1348 = vld [vmem:[%s7 + $0x80] sm:$0xff]
      %v1349 = vld [vmem:[%s7 + $0x88] sm:$0xff]
      %v1368 = vunpack.c.l.b16 %v1332
      %v1369 = vunpack.c.h.b16 %v1332
      %v1370 = vunpack.c.l.b16 %v1333
      %v1371 = vunpack.c.h.b16 %v1333
      %v1372 = vunpack.c.l.b16 %v1334
      %v1373 = vunpack.c.h.b16 %v1334
      %v1374 = vunpack.c.l.b16 %v1335
      %v1375 = vunpack.c.h.b16 %v1335
      %v1376 = vunpack.c.l.b16 %v1336
      %v1377 = vunpack.c.h.b16 %v1336
      %v1378 = vunpack.c.l.b16 %v1337
      %v1379 = vunpack.c.h.b16 %v1337
      %v1380 = vunpack.c.l.b16 %v1338
      %v1381 = vunpack.c.h.b16 %v1338
      %v1382 = vunpack.c.l.b16 %v1339
      %v1383 = vunpack.c.h.b16 %v1339
      %v1384 = vunpack.c.l.b16 %v1340
      %v1385 = vunpack.c.h.b16 %v1340
      %v1386 = vunpack.c.l.b16 %v1341
      %v1387 = vunpack.c.h.b16 %v1341
      %v1388 = vunpack.c.l.b16 %v1342
      %v1389 = vunpack.c.h.b16 %v1342
      %v1390 = vunpack.c.l.b16 %v1343
      %v1391 = vunpack.c.h.b16 %v1343
      %v1392 = vunpack.c.l.b16 %v1344
      %v1393 = vunpack.c.h.b16 %v1344
      %v1394 = vunpack.c.l.b16 %v1345
      %v1395 = vunpack.c.h.b16 %v1345
      %v1396 = vunpack.c.l.b16 %v1346
      %v1397 = vunpack.c.h.b16 %v1346
      %v1398 = vunpack.c.l.b16 %v1347
      %v1399 = vunpack.c.h.b16 %v1347
      %v1400 = vunpack.c.l.b16 %v1348
      %v1401 = vunpack.c.h.b16 %v1348
      %v1402 = vunpack.c.l.b16 %v1349
      %v1403 = vunpack.c.h.b16 %v1349
      %v1404 = vpack.c.b16 %v1370, %v1368
      %v1405 = vpack.c.b16 %v1371, %v1369
      %v1406 = vpack.c.b16 %v1374, %v1372
      %v1407 = vpack.c.b16 %v1375, %v1373
      %v1408 = vpack.c.b16 %v1378, %v1376
      %v1409 = vpack.c.b16 %v1379, %v1377
      %v1410 = vpack.c.b16 %v1382, %v1380
      %v1411 = vpack.c.b16 %v1383, %v1381
      %v1412 = vpack.c.b16 %v1386, %v1384
      %v1413 = vpack.c.b16 %v1387, %v1385
      %v1414 = vpack.c.b16 %v1390, %v1388
      %v1415 = vpack.c.b16 %v1391, %v1389
      %v1416 = vpack.c.b16 %v1394, %v1392
      %v1417 = vpack.c.b16 %v1395, %v1393
      %v1418 = vpack.c.b16 %v1398, %v1396
      %v1419 = vpack.c.b16 %v1399, %v1397
      %v1420 = vpack.c.b16 %v1402, %v1400
      %v1421 = vpack.c.b16 %v1403, %v1401
      %vm1440 = vcmask 130048
      %v1442 = vsel %vm1440, %v1327, 0
      %v1445 = vsel %vm1440, %v1329, 0
      %v1448 = vsel %vm1440, %v1331, 0
      %1450 = vmatprep.subr.bf16.mxu0 %v1405
      %1451 = vmatpush1.bf16.msra.mxu0 %v1404
      %1452 = vmatprep.subr.bf16.mxu0 %v1407
      %1453 = vmatpush1.bf16.msra.mxu0 %v1406
      %1454 = vmatprep.subr.bf16.mxu0 %v1409
      %1455 = vmatpush1.bf16.msra.mxu0 %v1408
      %1456 = vmatprep.subr.bf16.mxu0 %v1411
      %1457 = vmatpush1.bf16.msra.mxu0 %v1410
      %1458 = vmatprep.subr.bf16.mxu0 %v1413
      %1459 = vmatpush1.bf16.msra.mxu0 %v1412
      %1460 = vmatprep.subr.bf16.mxu0 %v1415
      %1461 = vmatpush1.bf16.msra.mxu0 %v1414
      %1462 = vmatprep.subr.bf16.mxu0 %v1417
      %1463 = vmatpush1.bf16.msra.mxu0 %v1416
      %1464 = vmatprep.subr.bf16.mxu0 %v1419
      %1465 = vmatpush1.bf16.msra.mxu0 %v1418
      %1466 = vmatprep.subr.bf16.mxu0 %v1421
      %1467 = vmatpush1.bf16.msra.mxu0 %v1420
      %1468 = vmatprep.subr.bf16.mxu0 0
      %1469 = vmatpush1.bf16.msra.mxu0 0
      %1470 = vmatprep.subr.bf16.mxu0 0
      %1471 = vmatpush1.bf16.msra.mxu0 0
      %1472 = vmatprep.subr.bf16.mxu0 0
      %1473 = vmatpush1.bf16.msra.mxu0 0
      %1474 = vmatprep.subr.bf16.mxu0 0
      %1475 = vmatpush1.bf16.msra.mxu0 0
      %1476 = vmatprep.subr.bf16.mxu0 0
      %1477 = vmatpush1.bf16.msra.mxu0 0
      %1478 = vmatprep.subr.bf16.mxu0 0
      %1479 = vmatpush1.bf16.msra.mxu0 0
      %1480 = vmatprep.subr.bf16.mxu0 0
      %1481 = vmatpush1.bf16.msra.mxu0 0
      %1482 = vmatprep.mubr.bf16.mxu0 %v1442
      %1483 = vmatmul.mubr.bf16.gmra.mrb[0].mxu0 %v1326
      %v1484 = vpop.f32.mrb[0].mxu0
      %v1485 = vadd.f32 0.0, %v1484
      %v1486 = vpop.f32.mrb[0].mxu0
      %v1487 = vadd.f32 0.0, %v1486
      %v1488 = vpop.f32.mrb[0].mxu0
      %v1489 = vadd.f32 0.0, %v1488
      %v1490 = vpop.f32.mrb[0].mxu0
      %v1491 = vadd.f32 0.0, %v1490
      %1492 = vmatprep.mubr.bf16.mxu0 %v1445
      %1493 = vmatmul.mubr.bf16.gmra.mrb[0].mxu0 %v1328
      %v1494 = vpop.f32.mrb[0].mxu0
      %v1495 = vadd.f32 0.0, %v1494
      %v1496 = vpop.f32.mrb[0].mxu0
      %v1497 = vadd.f32 0.0, %v1496
      %v1498 = vpop.f32.mrb[0].mxu0
      %v1499 = vadd.f32 0.0, %v1498
      %v1500 = vpop.f32.mrb[0].mxu0
      %v1501 = vadd.f32 0.0, %v1500
      %1502 = vmatprep.mubr.bf16.mxu0 %v1448
      %1503 = vmatmul.mubr.bf16.gmra.mrb[0].mxu0 %v1330
      %v1504 = vpop.f32.mrb[0].mxu0
      %v1505 = vadd.f32 0.0, %v1504
      %v1506 = vpop.f32.mrb[0].mxu0
      %v1507 = vadd.f32 0.0, %v1506
      %v1508 = vpop.f32.mrb[0].mxu0
      %v1509 = vadd.f32 0.0, %v1508
      %v1510 = vpop.f32.mrb[0].mxu0
      %v1511 = vadd.f32 0.0, %v1510
      %1512 = vdwg.mxu0
      %v1531 = vunpack.c.l.b16 %v1308
      %v1532 = vunpack.c.h.b16 %v1308
      %v1533 = vunpack.c.l.b16 %v1309
      %v1534 = vunpack.c.h.b16 %v1309
      %v1535 = vunpack.c.l.b16 %v1310
      %v1536 = vunpack.c.h.b16 %v1310
      %v1537 = vunpack.c.l.b16 %v1311
      %v1538 = vunpack.c.h.b16 %v1311
      %v1539 = vunpack.c.l.b16 %v1312
      %v1540 = vunpack.c.h.b16 %v1312
      %v1541 = vunpack.c.l.b16 %v1313
      %v1542 = vunpack.c.h.b16 %v1313
      %v1543 = vunpack.c.l.b16 %v1314
      %v1544 = vunpack.c.h.b16 %v1314
      %v1545 = vunpack.c.l.b16 %v1315
      %v1546 = vunpack.c.h.b16 %v1315
      %v1547 = vunpack.c.l.b16 %v1316
      %v1548 = vunpack.c.h.b16 %v1316
      %v1549 = vunpack.c.l.b16 %v1317
      %v1550 = vunpack.c.h.b16 %v1317
      %v1551 = vunpack.c.l.b16 %v1318
      %v1552 = vunpack.c.h.b16 %v1318
      %v1553 = vunpack.c.l.b16 %v1319
      %v1554 = vunpack.c.h.b16 %v1319
      %v1555 = vunpack.c.l.b16 %v1320
      %v1556 = vunpack.c.h.b16 %v1320
      %v1557 = vunpack.c.l.b16 %v1321
      %v1558 = vunpack.c.h.b16 %v1321
      %v1559 = vunpack.c.l.b16 %v1322
      %v1560 = vunpack.c.h.b16 %v1322
      %v1561 = vunpack.c.l.b16 %v1323
      %v1562 = vunpack.c.h.b16 %v1323
      %v1563 = vunpack.c.l.b16 %v1324
      %v1564 = vunpack.c.h.b16 %v1324
      %v1565 = vunpack.c.l.b16 %v1325
      %v1566 = vunpack.c.h.b16 %v1325
      %v1567 = vpack.c.b16 %v1533, %v1531
      %v1568 = vpack.c.b16 %v1534, %v1532
      %v1569 = vpack.c.b16 %v1537, %v1535
      %v1570 = vpack.c.b16 %v1538, %v1536
      %v1571 = vpack.c.b16 %v1541, %v1539
      %v1572 = vpack.c.b16 %v1542, %v1540
      %v1573 = vpack.c.b16 %v1545, %v1543
      %v1574 = vpack.c.b16 %v1546, %v1544
      %v1575 = vpack.c.b16 %v1549, %v1547
      %v1576 = vpack.c.b16 %v1550, %v1548
      %v1577 = vpack.c.b16 %v1553, %v1551
      %v1578 = vpack.c.b16 %v1554, %v1552
      %v1579 = vpack.c.b16 %v1557, %v1555
      %v1580 = vpack.c.b16 %v1558, %v1556
      %v1581 = vpack.c.b16 %v1561, %v1559
      %v1582 = vpack.c.b16 %v1562, %v1560
      %v1583 = vpack.c.b16 %v1565, %v1563
      %v1584 = vpack.c.b16 %v1566, %v1564
      %v1604 = vsel %vm1440, %v1303, 0
      %v1607 = vsel %vm1440, %v1305, 0
      %v1610 = vsel %vm1440, %v1307, 0
      %1612 = vmatprep.subr.bf16.mxu0 %v1568
      %1613 = vmatpush1.bf16.msra.mxu0 %v1567
      %1614 = vmatprep.subr.bf16.mxu0 %v1570
      %1615 = vmatpush1.bf16.msra.mxu0 %v1569
      %1616 = vmatprep.subr.bf16.mxu0 %v1572
      %1617 = vmatpush1.bf16.msra.mxu0 %v1571
      %1618 = vmatprep.subr.bf16.mxu0 %v1574
      %1619 = vmatpush1.bf16.msra.mxu0 %v1573
      %1620 = vmatprep.subr.bf16.mxu0 %v1576
      %1621 = vmatpush1.bf16.msra.mxu0 %v1575
      %1622 = vmatprep.subr.bf16.mxu0 %v1578
      %1623 = vmatpush1.bf16.msra.mxu0 %v1577
      %1624 = vmatprep.subr.bf16.mxu0 %v1580
      %1625 = vmatpush1.bf16.msra.mxu0 %v1579
      %1626 = vmatprep.subr.bf16.mxu0 %v1582
      %1627 = vmatpush1.bf16.msra.mxu0 %v1581
      %1628 = vmatprep.subr.bf16.mxu0 %v1584
      %1629 = vmatpush1.bf16.msra.mxu0 %v1583
      %1630 = vmatprep.subr.bf16.mxu0 0
      %1631 = vmatpush1.bf16.msra.mxu0 0
      %1632 = vmatprep.subr.bf16.mxu0 0
      %1633 = vmatpush1.bf16.msra.mxu0 0
      %1634 = vmatprep.subr.bf16.mxu0 0
      %1635 = vmatpush1.bf16.msra.mxu0 0
      %1636 = vmatprep.subr.bf16.mxu0 0
      %1637 = vmatpush1.bf16.msra.mxu0 0
      %1638 = vmatprep.subr.bf16.mxu0 0
      %1639 = vmatpush1.bf16.msra.mxu0 0
      %1640 = vmatprep.subr.bf16.mxu0 0
      %1641 = vmatpush1.bf16.msra.mxu0 0
      %1642 = vmatprep.subr.bf16.mxu0 0
      %1643 = vmatpush1.bf16.msra.mxu0 0
      %1644 = vmatprep.mubr.bf16.mxu0 %v1604
      %1645 = vmatmul.mubr.bf16.gmra.mrb[0].mxu0 %v1302
      %v1646 = vpop.f32.mrb[0].mxu0
      %v1647 = vadd.f32 %v1485, %v1646
      %v1648 = vpop.f32.mrb[0].mxu0
      %v1649 = vadd.f32 %v1487, %v1648
      %v1650 = vpop.f32.mrb[0].mxu0
      %v1651 = vadd.f32 %v1489, %v1650
      %v1652 = vpop.f32.mrb[0].mxu0
      %v1653 = vadd.f32 %v1491, %v1652
      %1654 = vmatprep.mubr.bf16.mxu0 %v1607
      %1655 = vmatmul.mubr.bf16.gmra.mrb[0].mxu0 %v1304
      %v1656 = vpop.f32.mrb[0].mxu0
      %v1657 = vadd.f32 %v1495, %v1656
      %v1658 = vpop.f32.mrb[0].mxu0
      %v1659 = vadd.f32 %v1497, %v1658
      %v1660 = vpop.f32.mrb[0].mxu0
      %v1661 = vadd.f32 %v1499, %v1660
      %v1662 = vpop.f32.mrb[0].mxu0
      %v1663 = vadd.f32 %v1501, %v1662
      %1664 = vmatprep.mubr.bf16.mxu0 %v1610
      %1665 = vmatmul.mubr.bf16.gmra.mrb[0].mxu0 %v1306
      %v1666 = vpop.f32.mrb[0].mxu0
      %v1667 = vadd.f32 %v1505, %v1666
      %v1668 = vpop.f32.mrb[0].mxu0
      %v1669 = vadd.f32 %v1507, %v1668
      %v1670 = vpop.f32.mrb[0].mxu0
      %v1671 = vadd.f32 %v1509, %v1670
      %v1672 = vpop.f32.mrb[0].mxu0
      %v1673 = vadd.f32 %v1511, %v1672
      %1674 = vdwg.mxu0
      %v1675 = vld [vmem:[%s8] sm:$0xf]
      %v1676 = vld [vmem:[%s8 + $0x4] sm:$0xf]
      %v1677 = vld [vmem:[%s8 + $0x8] sm:$0xf]
      %v1678 = vld [vmem:[%s8 + $0xc] sm:$0xf]
      %v1679 = vld [vmem:[%s8 + $0x10] sm:$0xf]
      %v1680 = vld [vmem:[%s8 + $0x14] sm:$0xf]
      %v1681 = vld [vmem:[%s8 + $0x18] sm:$0xf]
      %v1682 = vld [vmem:[%s8 + $0x1c] sm:$0xf]
      %v1683 = vld [vmem:[%s8 + $0x20] sm:$0xf]
      %v1684 = vld [vmem:[%s8 + $0x24] sm:$0xf]
      %v1685 = vld [vmem:[%s8 + $0x28] sm:$0xf]
      %v1686 = vld [vmem:[%s8 + $0x2c] sm:$0xf]
      %v1687 = vadd.f32 %v436, %v1647
      %v1688 = vadd.f32 %v437, %v1649
      %v1689 = vadd.f32 %v438, %v1651
      %v1690 = vadd.f32 %v439, %v1653
      %v1691 = vadd.f32 %v440, %v1657
      %v1692 = vadd.f32 %v441, %v1659
      %v1693 = vadd.f32 %v518, %v1661
      %v1694 = vadd.f32 %v519, %v1663
      %v1695 = vadd.f32 %v520, %v1667
      %v1696 = vadd.f32 %v521, %v1669
      %v1697 = vadd.f32 %v522, %v1671
      %v1698 = vadd.f32 %v523, %v1673
      %v1699 = vpack.c.bf16 %v1689, %v1687
      %v1700 = vpack.c.bf16 %v1690, %v1688
      %v1701 = vpack.c.bf16 %v1693, %v1691
      %v1702 = vpack.c.bf16 %v1694, %v1692
      %v1703 = vpack.c.bf16 %v1697, %v1695
      %v1704 = vpack.c.bf16 %v1698, %v1696
      %v1717 = vunpack.c.l.b16 %v1675
      %v1718 = vunpack.c.l.b16 %v1676
      %v1719 = vunpack.c.l.b16 %v1677
      %v1720 = vunpack.c.l.b16 %v1678
      %v1721 = vunpack.c.l.b16 %v1679
      %v1722 = vunpack.c.l.b16 %v1680
      %v1723 = vunpack.c.l.b16 %v1681
      %v1724 = vunpack.c.l.b16 %v1682
      %v1725 = vunpack.c.l.b16 %v1683
      %v1726 = vunpack.c.l.b16 %v1684
      %v1727 = vunpack.c.l.b16 %v1685
      %v1728 = vunpack.c.l.b16 %v1686
      %v1729 = vpack.c.b16 %v1718, %v1717
      %v1730 = vpack.c.b16 %v1720, %v1719
      %v1731 = vpack.c.b16 %v1722, %v1721
      %v1732 = vpack.c.b16 %v1724, %v1723
      %v1733 = vpack.c.b16 %v1726, %v1725
      %v1734 = vpack.c.b16 %v1728, %v1727
      %vm1735 = vcmask 392192
      %v1737 = vsel %vm1735, %v1729, 0
      %v1740 = vsel %vm1735, %v1730, 0
      %v1743 = vsel %vm1735, %v1731, 0
      %v1746 = vsel %vm1735, %v1732, 0
      %v1749 = vsel %vm1735, %v1733, 0
      %v1752 = vsel %vm1735, %v1734, 0
      %1754 = vmatprep.subr.bf16.mxu0 %v1700
      %1755 = vmatpush1.bf16.msra.mxu0 %v1699
      %1756 = vmatprep.subr.bf16.mxu0 %v1702
      %1757 = vmatpush1.bf16.msra.mxu0 %v1701
      %1758 = vmatprep.subr.bf16.mxu0 %v1704
      %1759 = vmatpush1.bf16.msra.mxu0 %v1703
      %1760 = vmatprep.subr.bf16.mxu0 0
      %1761 = vmatpush1.bf16.msra.mxu0 0
      %1762 = vmatprep.subr.bf16.mxu0 0
      %1763 = vmatpush1.bf16.msra.mxu0 0
      %1764 = vmatprep.subr.bf16.mxu0 0
      %1765 = vmatpush1.bf16.msra.mxu0 0
      %1766 = vmatprep.subr.bf16.mxu0 0
      %1767 = vmatpush1.bf16.msra.mxu0 0
      %1768 = vmatprep.subr.bf16.mxu0 0
      %1769 = vmatpush1.bf16.msra.mxu0 0
      %1770 = vmatprep.subr.bf16.mxu0 0
      %1771 = vmatpush1.bf16.msra.mxu0 0
      %1772 = vmatprep.subr.bf16.mxu0 0
      %1773 = vmatpush1.bf16.msra.mxu0 0
      %1774 = vmatprep.subr.bf16.mxu0 0
      %1775 = vmatpush1.bf16.msra.mxu0 0
      %1776 = vmatprep.subr.bf16.mxu0 0
      %1777 = vmatpush1.bf16.msra.mxu0 0
      %1778 = vmatprep.subr.bf16.mxu0 0
      %1779 = vmatpush1.bf16.msra.mxu0 0
      %1780 = vmatprep.subr.bf16.mxu0 0
      %1781 = vmatpush1.bf16.msra.mxu0 0
      %1782 = vmatprep.subr.bf16.mxu0 0
      %1783 = vmatpush1.bf16.msra.mxu0 0
      %1784 = vmatprep.subr.bf16.mxu0 0
      %1785 = vmatpush1.bf16.msra.mxu0 0
      %1786 = vmatprep.mubr.bf16.mxu0 0
      %1787 = vmatmul.mubr.bf16.gmra.mrb[0].mxu0 %v1737
      %v1788 = vpop.f32.mrb[0].mxu0
      %v1789 = vadd.f32 0.0, %v1788
      %v1790 = vpop.f32.mrb[0].mxu0
      %v1791 = vadd.f32 0.0, %v1790
      %v1792 = vpop.f32.mrb[0].mxu0
      %v1793 = vadd.f32 0.0, %v1792
      %v1794 = vpop.f32.mrb[0].mxu0
      %v1795 = vadd.f32 0.0, %v1794
      %1796 = vmatprep.mubr.bf16.mxu0 0
      %1797 = vmatmul.mubr.bf16.gmra.mrb[0].mxu0 %v1740
      %v1798 = vpop.f32.mrb[0].mxu0
      %v1799 = vadd.f32 0.0, %v1798
      %v1800 = vpop.f32.mrb[0].mxu0
      %v1801 = vadd.f32 0.0, %v1800
      %v1802 = vpop.f32.mrb[0].mxu0
      %v1803 = vadd.f32 0.0, %v1802
      %v1804 = vpop.f32.mrb[0].mxu0
      %v1805 = vadd.f32 0.0, %v1804
      %1806 = vmatprep.mubr.bf16.mxu0 0
      %1807 = vmatmul.mubr.bf16.gmra.mrb[0].mxu0 %v1743
      %v1808 = vpop.f32.mrb[0].mxu0
      %v1809 = vadd.f32 0.0, %v1808
      %v1810 = vpop.f32.mrb[0].mxu0
      %v1811 = vadd.f32 0.0, %v1810
      %v1812 = vpop.f32.mrb[0].mxu0
      %v1813 = vadd.f32 0.0, %v1812
      %v1814 = vpop.f32.mrb[0].mxu0
      %v1815 = vadd.f32 0.0, %v1814
      %1816 = vmatprep.mubr.bf16.mxu0 0
      %1817 = vmatmul.mubr.bf16.gmra.mrb[0].mxu0 %v1746
      %v1818 = vpop.f32.mrb[0].mxu0
      %v1819 = vadd.f32 0.0, %v1818
      %v1820 = vpop.f32.mrb[0].mxu0
      %v1821 = vadd.f32 0.0, %v1820
      %v1822 = vpop.f32.mrb[0].mxu0
      %v1823 = vadd.f32 0.0, %v1822
      %v1824 = vpop.f32.mrb[0].mxu0
      %v1825 = vadd.f32 0.0, %v1824
      %1826 = vmatprep.mubr.bf16.mxu0 0
      %1827 = vmatmul.mubr.bf16.gmra.mrb[0].mxu0 %v1749
      %v1828 = vpop.f32.mrb[0].mxu0
      %v1829 = vadd.f32 0.0, %v1828
      %v1830 = vpop.f32.mrb[0].mxu0
      %v1831 = vadd.f32 0.0, %v1830
      %v1832 = vpop.f32.mrb[0].mxu0
      %v1833 = vadd.f32 0.0, %v1832
      %v1834 = vpop.f32.mrb[0].mxu0
      %v1835 = vadd.f32 0.0, %v1834
      %1836 = vmatprep.mubr.bf16.mxu0 0
      %1837 = vmatmul.mubr.bf16.gmra.mrb[0].mxu0 %v1752
      %v1838 = vpop.f32.mrb[0].mxu0
      %v1839 = vadd.f32 0.0, %v1838
      %v1840 = vpop.f32.mrb[0].mxu0
      %v1841 = vadd.f32 0.0, %v1840
      %v1842 = vpop.f32.mrb[0].mxu0
      %v1843 = vadd.f32 0.0, %v1842
      %v1844 = vpop.f32.mrb[0].mxu0
      %v1845 = vadd.f32 0.0, %v1844
      %1846 = vdwg.mxu0
      %1847 = vst [vmem:[%s339] sm:$0xff] %v1789
      %1848 = vst [vmem:[%s339 + $0x8] sm:$0xff] %v1791
      %1849 = vst [vmem:[%s339 + $0x10] sm:$0xff] %v1793
      %1850 = vst [vmem:[%s339 + $0x18] sm:$0xff] %v1795
      %1851 = vst [vmem:[%s339 + $0x20] sm:$0xff] %v1799
      %1852 = vst [vmem:[%s339 + $0x28] sm:$0xff] %v1801
      %1853 = vst [vmem:[%s339 + $0x30] sm:$0xff] %v1803
      %1854 = vst [vmem:[%s339 + $0x38] sm:$0xff] %v1805
      %1855 = vst [vmem:[%s339 + $0x40] sm:$0xff] %v1809
      %1856 = vst [vmem:[%s339 + $0x48] sm:$0xff] %v1811
      %1857 = vst [vmem:[%s339 + $0x50] sm:$0xff] %v1813
      %1858 = vst [vmem:[%s339 + $0x58] sm:$0xff] %v1815
      %s1859 = scalar_lea.vmem %s339, 96
      %1860 = vst [vmem:[%s1859] sm:$0xff] %v1819
      %1861 = vst [vmem:[%s1859 + $0x8] sm:$0xff] %v1821
      %1862 = vst [vmem:[%s1859 + $0x10] sm:$0xff] %v1823
      %1863 = vst [vmem:[%s1859 + $0x18] sm:$0xff] %v1825
      %1864 = vst [vmem:[%s1859 + $0x20] sm:$0xff] %v1829
      %1865 = vst [vmem:[%s1859 + $0x28] sm:$0xff] %v1831
      %1866 = vst [vmem:[%s1859 + $0x30] sm:$0xff] %v1833
      %1867 = vst [vmem:[%s1859 + $0x38] sm:$0xff] %v1835
      %1868 = vst [vmem:[%s1859 + $0x40] sm:$0xff] %v1839
      %1869 = vst [vmem:[%s1859 + $0x48] sm:$0xff] %v1841
      %1870 = vst [vmem:[%s1859 + $0x50] sm:$0xff] %v1843
      %1871 = vst [vmem:[%s1859 + $0x58] sm:$0xff] %v1845
      %s1872 = smul.u32 2, %s20
      %p1873 = scmp.lt.s32.totalorder %s1872, 3
      %s1874 = scalar_select %p1873, %s1872, 3
      %s1875 = smul.addr %s1874, 12
      %s1876 = smul.addr %s1875, 8
      %s1877 = scalar_lea.vmem %s9, %s1876
      // Predicated region
      $region57: #{cross_fourier_conv2d.1} parent=55 // pred_check
        %p1878 = pneg %p232
      $region58: #{cross_fourier_conv2d.1} parent=55 // pred_check_branch
        %1880 = sbr.rel (%p1878) target = $region60
      $region59: #{cross_fourier_conv2d.1} parent=55 // pred_region
        %s1881 = smul.u32 2, %s20
      $region60: #{cross_fourier_conv2d.1} parent=55 // pred_fallthru
        _
    $region56: #{cross_fourier_conv2d.1} parent=5 // pred_fallthru
      _
    %p1882 = scmp.le.s32.totalorder 2, %s15
    // Predicated region
    $region61: #{cross_fourier_conv2d.1} parent=5 // pred_check
      %p1883 = pneg %p1882
    $region62: #{cross_fourier_conv2d.1} parent=5 // pred_check_branch
      %1885 = sbr.rel (%p1883) target = $region64
    $region63: #{cross_fourier_conv2d.1} parent=5 // pred_region
      %s1886 = ssub.s32 %s15, 2
      // Predicated region
      $region65: #{cross_fourier_conv2d.1} parent=63 // pred_check
        %p1887 = pneg %p238
      $region66: #{cross_fourier_conv2d.1} parent=63 // pred_check_branch
        %1889 = sbr.rel (%p1887) target = $region68
      $region67: #{cross_fourier_conv2d.1} parent=63 // pred_region
        %s1890 = smul.u32 2, %s21
        %p1891 = scmp.lt.s32.totalorder %s1890, 3
        %s1892 = scalar_select %p1891, %s1890, 3
        %s1893 = smul.addr %s1892, 12
        %s1894 = smul.addr %s1893, 8
        %s1895 = scalar_lea.vmem %s9, %s1894
      $region68: #{cross_fourier_conv2d.1} parent=63 // pred_fallthru
        _
    $region64: #{cross_fourier_conv2d.1} parent=5 // pred_fallthru
      _
  $region6: #{cross_fourier_conv2d.1} parent=0 // loop_footer
    %s19 = sadd.s32 1, %s15
  $region7: #{cross_fourier_conv2d.1} parent=0 // loop_footer_branch
    %14 = sbr.rel target = $region3
  $region8: #{cross_fourier_conv2d.1} parent=0 // loop_exit
    _

</llo_original>
